<compile_context>
chip_gen: v5e
topology: v5e:2x2
jax: 0.10.0
libtpu: 0.0.40
codegen_flags: <defaults>
</compile_context>

<pallas_src>
import math
import functools

import jax
import jax.numpy as jnp
from jax import lax
from jax.experimental import pallas as pl
from jax.experimental.pallas import tpu as pltpu


def _layer_norm(x, gamma, beta, eps=1e-5):
    """LayerNorm over the last dim with single-pass (sum, sumsq) statistics."""
    d = x.shape[-1]
    s = jnp.sum(x, axis=-1, keepdims=True)
    sq = jnp.sum(x * x, axis=-1, keepdims=True)
    mean = s / d
    var = jnp.maximum(sq / d - mean * mean, 0.0)   # clamp tiny negatives from cancellation
    inv = lax.rsqrt(var + eps)
    return (x - mean) * inv * gamma + beta


def _encoder_block_kernel(x_ref, ln1g_ref, ln1b_ref,
                          wq_ref, wk_ref, wv_ref, wo_ref,
                          ln2g_ref, ln2b_ref,
                          w1_ref, b1_ref, w2_ref, b2_ref,
                          o_ref, *, num_heads, is_first):
    # x_ref: [T, D] (one batch sample); weights pre-transposed to [in, out].
    x = x_ref[...].astype(jnp.float32)                     # [T, D]
    t, d = x.shape
    hd = d // num_heads
    scale = 1.0 / math.sqrt(hd)

    # ---- pre-attention LayerNorm ----
    xn = _layer_norm(x, ln1g_ref[...], ln1b_ref[...])

    # ---- Q/K/V projections (no bias), MXU matmuls ----
    q = jnp.dot(xn, wq_ref[...], preferred_element_type=jnp.float32) * scale
    k = jnp.dot(xn, wk_ref[...], preferred_element_type=jnp.float32)
    v = jnp.dot(xn, wv_ref[...], preferred_element_type=jnp.float32)

    wo = wo_ref[...]                                        # [D, D] (in, out)

    # ---- per-head attention with fused output projection (static unrolled loop) ----
    attn_out = jnp.zeros((t, d), jnp.float32)
    for h in range(num_heads):
        lo = h * hd
        qh = q[:, lo:lo + hd]                               # [T, hd]
        kh = k[:, lo:lo + hd]
        vh = v[:, lo:lo + hd]
        # scores = qh @ kh^T (contract last dims; no explicit transpose)
        s = lax.dot_general(qh, kh, (((1,), (1,)), ((), ())),
                            preferred_element_type=jnp.float32)     # [T, T]
        m = jnp.max(s, axis=-1, keepdims=True)
        p = jnp.exp(s - m)
        p = p / jnp.sum(p, axis=-1, keepdims=True)
        oh = jnp.dot(p, vh, preferred_element_type=jnp.float32)     # [T, hd]
        # fuse this head's slice of the output projection (avoids concatenate)
        attn_out = attn_out + jnp.dot(oh, wo[lo:lo + hd, :],
                                      preferred_element_type=jnp.float32)

    # residual base: normalized input if is_first else raw input (matches module)
    base = xn if is_first else x
    res1 = base + attn_out

    # ---- FFN: LN -> Linear(D,4D)+bias -> ReLU -> Linear(4D,D)+bias ----
    yn = _layer_norm(res1, ln2g_ref[...], ln2b_ref[...])
    h1 = jnp.dot(yn, w1_ref[...], preferred_element_type=jnp.float32) + b1_ref[...]
    h1 = jnp.maximum(h1, 0.0)
    ffn = jnp.dot(h1, w2_ref[...], preferred_element_type=jnp.float32) + b2_ref[...]

    o_ref[...] = (res1 + ffn).astype(o_ref.dtype)


def transformer_encoder_block_forward(x,
                                      ln1_gamma, ln1_beta,
                                      wq, wk, wv, wo,
                                      ln2_gamma, ln2_beta,
                                      w1, b1, w2, b2,
                                      *, num_heads, is_first=False):
    """Pallas implementation of TransformerEncoderBlock.forward (inference).

    x:                  [B, T, D]
    wq/wk/wv/wo:        [D, D]      (PyTorch Linear layout: [out, in], no bias)
    w1: [4D, D], b1: [4D]; w2: [D, 4D], b2: [D]
    ln*_gamma/beta:     [D]
    returns:            [B, T, D]
    """
    b, t, d = x.shape
    assert d % num_heads == 0
    dff = w1.shape[0]
    f32 = jnp.float32

    # Pre-transpose Linear weights once to [in, out] so the kernel does x @ W_t.
    wq_t = wq.T.astype(f32)
    wk_t = wk.T.astype(f32)
    wv_t = wv.T.astype(f32)
    wo_t = wo.T.astype(f32)
    w1_t = w1.T.astype(f32)
    w2_t = w2.T.astype(f32)
    ln1g = ln1_gamma.reshape(1, d).astype(f32)
    ln1b = ln1_beta.reshape(1, d).astype(f32)
    ln2g = ln2_gamma.reshape(1, d).astype(f32)
    ln2b = ln2_beta.reshape(1, d).astype(f32)
    b1r = b1.reshape(1, dff).astype(f32)
    b2r = b2.reshape(1, d).astype(f32)

    kernel = functools.partial(_encoder_block_kernel,
                               num_heads=num_heads, is_first=is_first)

    def shared(blk):
        # constant block index -> weight stays resident in VMEM across grid steps
        return pl.BlockSpec(blk, lambda i: (0, 0))

    return pl.pallas_call(
        kernel,
        out_shape=jax.ShapeDtypeStruct((b, t, d), x.dtype),
        grid_spec=pltpu.PrefetchScalarGridSpec(
            num_scalar_prefetch=0,
            grid=(b,),
            in_specs=[
                pl.BlockSpec((None, t, d), lambda i: (i, 0, 0)),   # per-sample x
                shared((1, d)), shared((1, d)),                    # ln1 gamma / beta
                shared((d, d)), shared((d, d)),                    # wq_t, wk_t
                shared((d, d)), shared((d, d)),                    # wv_t, wo_t
                shared((1, d)), shared((1, d)),                    # ln2 gamma / beta
                shared((d, dff)), shared((1, dff)),                # w1_t, b1
                shared((dff, d)), shared((1, d)),                  # w2_t, b2
            ],
            out_specs=pl.BlockSpec((None, t, d), lambda i: (i, 0, 0)),
        ),
        compiler_params=pltpu.CompilerParams(
            dimension_semantics=("parallel",)),   # v7x megacore: samples across TCs
    )(x, ln1g, ln1b, wq_t, wk_t, wv_t, wo_t,
      ln2g, ln2b, w1_t, b1r, w2_t, b2r)


def _reference_forward(x, ln1_g, ln1_b, wq, wk, wv, wo, ln2_g, ln2_b,
                       w1, b1, w2, b2, *, num_heads, is_first=False):
    """Pure-JAX reference matching the PyTorch module (eval mode, dropout=0)."""
    def ln(z, g, bb, eps=1e-5):
        m = jnp.mean(z, axis=-1, keepdims=True)
        var = jnp.mean((z - m) ** 2, axis=-1, keepdims=True)
        return (z - m) / jnp.sqrt(var + eps) * g + bb

    B, T, D = x.shape
    hd = D // num_heads
    xn = ln(x, ln1_g, ln1_b)
    q = (xn @ wq.T).reshape(B, T, num_heads, hd).transpose(0, 2, 1, 3)
    k = (xn @ wk.T).reshape(B, T, num_heads, hd).transpose(0, 2, 1, 3)
    v = (xn @ wv.T).reshape(B, T, num_heads, hd).transpose(0, 2, 1, 3)
    q = q * hd ** (-0.5)
    attn = jax.nn.softmax(q @ jnp.swapaxes(k, -1, -2), axis=-1)
    out = (attn @ v).transpose(0, 2, 1, 3).reshape(B, T, D)
    out = out @ wo.T
    base = xn if is_first else x
    res1 = base + out
    yn = ln(res1, ln2_g, ln2_b)
    h = jax.nn.relu(yn @ w1.T + b1)
    ffn = h @ w2.T + b2
    return res1 + ffn


if __name__ == "__main__":
    # Small shapes consistent with the module: B=2, T=8, d_model=32, 4 heads, ffn=4*d_model.
    B, T, D, H = 2, 8, 32, 4
    DFF = 4 * D

    key = jax.random.PRNGKey(0)
    ks = jax.random.split(key, 10)
    x = jax.random.normal(ks[0], (B, T, D), dtype=jnp.float32)

    def xavier_uniform(k, shape, gain=1.0):
        fan_out, fan_in = shape
        bound = gain * math.sqrt(6.0 / (fan_in + fan_out))
        return jax.random.uniform(k, shape, jnp.float32, minval=-bound, maxval=bound)

    def kaiming_uniform_relu(k, shape):
        fan_in = shape[1]
        bound = math.sqrt(6.0 / fan_in)
        return jax.random.uniform(k, shape, jnp.float32, minval=-bound, maxval=bound)

    # Attention projections: xavier_uniform (gain=1.0), no bias.
    wq = xavier_uniform(ks[1], (D, D))
    wk = xavier_uniform(ks[2], (D, D))
    wv = xavier_uniform(ks[3], (D, D))
    wo = xavier_uniform(ks[4], (D, D))
    # FFN: Linear(D, 4D) kaiming(relu) + zero bias, Linear(4D, D) xavier + zero bias.
    w1 = kaiming_uniform_relu(ks[5], (DFF, D))
    b1 = jnp.zeros((DFF,), jnp.float32)
    w2 = xavier_uniform(ks[6], (D, DFF))
    b2 = jnp.zeros((D,), jnp.float32)
    # LayerNorm affine params (defaults are ones/zeros; perturb so the affine path
    # is exercised by the correctness check).
    ln1_g = 1.0 + 0.1 * jax.random.normal(ks[7], (D,), jnp.float32)
    ln1_b = 0.1 * jax.random.normal(ks[8], (D,), jnp.float32)
    ln2_g = 1.0 + 0.1 * jax.random.normal(ks[9], (D,), jnp.float32)
    ln2_b = jnp.zeros((D,), jnp.float32)

    fwd = jax.jit(functools.partial(transformer_encoder_block_forward,
                                    num_heads=H, is_first=False))
    out = fwd(x, ln1_g, ln1_b, wq, wk, wv, wo, ln2_g, ln2_b, w1, b1, w2, b2)
    jax.block_until_ready(out)

    ref = _reference_forward(x, ln1_g, ln1_b, wq, wk, wv, wo, ln2_g, ln2_b,
                             w1, b1, w2, b2, num_heads=H, is_first=False)
    assert out.shape == (B, T, D), out.shape
    max_err = float(jnp.max(jnp.abs(out - ref)))
    assert jnp.allclose(out, ref, rtol=2e-3, atol=2e-3), f"mismatch vs reference: {max_err}"

    print("KERNEL_OK")
</pallas_src>

<mosaic_0001>
module attributes {stable_mosaic.version = 11 : i64} {
  func.func @_encoder_block_kernel(%arg0: i32, %arg1: memref<1x8x32xf32, #tpu.memory_space<vmem>>, %arg2: memref<1x32xf32, #tpu.memory_space<vmem>>, %arg3: memref<1x32xf32, #tpu.memory_space<vmem>>, %arg4: memref<32x32xf32, #tpu.memory_space<vmem>>, %arg5: memref<32x32xf32, #tpu.memory_space<vmem>>, %arg6: memref<32x32xf32, #tpu.memory_space<vmem>>, %arg7: memref<32x32xf32, #tpu.memory_space<vmem>>, %arg8: memref<1x32xf32, #tpu.memory_space<vmem>>, %arg9: memref<1x32xf32, #tpu.memory_space<vmem>>, %arg10: memref<32x128xf32, #tpu.memory_space<vmem>>, %arg11: memref<1x128xf32, #tpu.memory_space<vmem>>, %arg12: memref<128x32xf32, #tpu.memory_space<vmem>>, %arg13: memref<1x32xf32, #tpu.memory_space<vmem>>, %arg14: memref<1x8x32xf32, #tpu.memory_space<vmem>>) attributes {dimension_semantics = [#tpu.dimension_semantics<parallel>], iteration_bounds = array<i64: 2>, scalar_prefetch = 0 : i64, scratch_operands = 0 : i64, tpu.core_type = #tpu.core_type<tc>, window_params = [{transform_indices = @transform_0, window_bounds = array<i64: 1, 8, 32>}, {pipeline_mode = #tpu.pipeline_mode<synchronous>, transform_indices = @transform_1, window_bounds = array<i64: 1, 32>}, {pipeline_mode = #tpu.pipeline_mode<synchronous>, transform_indices = @transform_2, window_bounds = array<i64: 1, 32>}, {pipeline_mode = #tpu.pipeline_mode<synchronous>, transform_indices = @transform_3, window_bounds = array<i64: 32, 32>}, {pipeline_mode = #tpu.pipeline_mode<synchronous>, transform_indices = @transform_4, window_bounds = array<i64: 32, 32>}, {pipeline_mode = #tpu.pipeline_mode<synchronous>, transform_indices = @transform_5, window_bounds = array<i64: 32, 32>}, {pipeline_mode = #tpu.pipeline_mode<synchronous>, transform_indices = @transform_6, window_bounds = array<i64: 32, 32>}, {pipeline_mode = #tpu.pipeline_mode<synchronous>, transform_indices = @transform_7, window_bounds = array<i64: 1, 32>}, {pipeline_mode = #tpu.pipeline_mode<synchronous>, transform_indices = @transform_8, window_bounds = array<i64: 1, 32>}, {pipeline_mode = #tpu.pipeline_mode<synchronous>, transform_indices = @transform_9, window_bounds = array<i64: 32, 128>}, {pipeline_mode = #tpu.pipeline_mode<synchronous>, transform_indices = @transform_10, window_bounds = array<i64: 1, 128>}, {pipeline_mode = #tpu.pipeline_mode<synchronous>, transform_indices = @transform_11, window_bounds = array<i64: 128, 32>}, {pipeline_mode = #tpu.pipeline_mode<synchronous>, transform_indices = @transform_12, window_bounds = array<i64: 1, 32>}, {transform_indices = @transform_13, window_bounds = array<i64: 1, 8, 32>}]} {
    %c0 = arith.constant 0 : index
    %c0_0 = arith.constant 0 : index
    %c0_1 = arith.constant 0 : index
    %0 = vector.load %arg1[%c0, %c0_0, %c0_1] : memref<1x8x32xf32, #tpu.memory_space<vmem>>, vector<1x8x32xf32>
    %1 = vector.shape_cast %0 : vector<1x8x32xf32> to vector<8x32xf32>
    %c0_2 = arith.constant 0 : index
    %c0_3 = arith.constant 0 : index
    %2 = vector.load %arg2[%c0_2, %c0_3] : memref<1x32xf32, #tpu.memory_space<vmem>>, vector<1x32xf32>
    %c0_4 = arith.constant 0 : index
    %c0_5 = arith.constant 0 : index
    %3 = vector.load %arg3[%c0_4, %c0_5] : memref<1x32xf32, #tpu.memory_space<vmem>>, vector<1x32xf32>
    %cst = arith.constant dense<0.000000e+00> : vector<8xf32>
    %4 = vector.multi_reduction <add>, %1, %cst [1] : vector<8x32xf32> to vector<8xf32>
    %5 = vector.shape_cast %4 : vector<8xf32> to vector<8x1xf32>
    %6 = arith.mulf %1, %1 : vector<8x32xf32>
    %cst_6 = arith.constant dense<0.000000e+00> : vector<8xf32>
    %7 = vector.multi_reduction <add>, %6, %cst_6 [1] : vector<8x32xf32> to vector<8xf32>
    %8 = vector.shape_cast %7 : vector<8xf32> to vector<8x1xf32>
    %cst_7 = arith.constant 3.200000e+01 : f32
    %9 = vector.broadcast %cst_7 : f32 to vector<8x1xf32>
    %10 = arith.divf %5, %9 : vector<8x1xf32>
    %cst_8 = arith.constant 3.200000e+01 : f32
    %11 = vector.broadcast %cst_8 : f32 to vector<8x1xf32>
    %12 = arith.divf %8, %11 : vector<8x1xf32>
    %13 = arith.mulf %10, %10 : vector<8x1xf32>
    %14 = arith.subf %12, %13 : vector<8x1xf32>
    %cst_9 = arith.constant 0.000000e+00 : f32
    %15 = vector.broadcast %cst_9 : f32 to vector<8x1xf32>
    %16 = arith.maximumf %14, %15 : vector<8x1xf32>
    %cst_10 = arith.constant 9.99999974E-6 : f32
    %17 = vector.broadcast %cst_10 : f32 to vector<8x1xf32>
    %18 = arith.addf %16, %17 : vector<8x1xf32>
    %19 = math.rsqrt %18 : vector<8x1xf32>
    %20 = vector.broadcast %10 : vector<8x1xf32> to vector<8x32xf32>
    %21 = arith.subf %1, %20 : vector<8x32xf32>
    %22 = vector.broadcast %19 : vector<8x1xf32> to vector<8x32xf32>
    %23 = arith.mulf %21, %22 : vector<8x32xf32>
    %24 = vector.broadcast %2 : vector<1x32xf32> to vector<8x32xf32>
    %25 = arith.mulf %23, %24 : vector<8x32xf32>
    %26 = vector.broadcast %3 : vector<1x32xf32> to vector<8x32xf32>
    %27 = arith.addf %25, %26 : vector<8x32xf32>
    %c0_11 = arith.constant 0 : index
    %c0_12 = arith.constant 0 : index
    %28 = vector.load %arg4[%c0_11, %c0_12] : memref<32x32xf32, #tpu.memory_space<vmem>>, vector<32x32xf32>
    %cst_13 = arith.constant dense<0.000000e+00> : vector<8x32xf32>
    %29 = tpu.matmul %27, %28, %cst_13 {dimension_numbers = #tpu.dot_dimension_numbers<[1], [0], [0], [1], [0, 0, 1, 1], [], []>} : vector<8x32xf32>, vector<32x32xf32>, vector<8x32xf32> -> vector<8x32xf32>
    %cst_14 = arith.constant 0.353553385 : f32
    %30 = vector.broadcast %cst_14 : f32 to vector<8x32xf32>
    %31 = arith.mulf %29, %30 : vector<8x32xf32>
    %c0_15 = arith.constant 0 : index
    %c0_16 = arith.constant 0 : index
    %32 = vector.load %arg5[%c0_15, %c0_16] : memref<32x32xf32, #tpu.memory_space<vmem>>, vector<32x32xf32>
    %cst_17 = arith.constant dense<0.000000e+00> : vector<8x32xf32>
    %33 = tpu.matmul %27, %32, %cst_17 {dimension_numbers = #tpu.dot_dimension_numbers<[1], [0], [0], [1], [0, 0, 1, 1], [], []>} : vector<8x32xf32>, vector<32x32xf32>, vector<8x32xf32> -> vector<8x32xf32>
    %c0_18 = arith.constant 0 : index
    %c0_19 = arith.constant 0 : index
    %34 = vector.load %arg6[%c0_18, %c0_19] : memref<32x32xf32, #tpu.memory_space<vmem>>, vector<32x32xf32>
    %cst_20 = arith.constant dense<0.000000e+00> : vector<8x32xf32>
    %35 = tpu.matmul %27, %34, %cst_20 {dimension_numbers = #tpu.dot_dimension_numbers<[1], [0], [0], [1], [0, 0, 1, 1], [], []>} : vector<8x32xf32>, vector<32x32xf32>, vector<8x32xf32> -> vector<8x32xf32>
    %c0_21 = arith.constant 0 : index
    %c0_22 = arith.constant 0 : index
    %36 = vector.load %arg7[%c0_21, %c0_22] : memref<32x32xf32, #tpu.memory_space<vmem>>, vector<32x32xf32>
    %cst_23 = arith.constant 0.000000e+00 : f32
    %37 = vector.broadcast %cst_23 : f32 to vector<8x32xf32>
    %38 = vector.extract_strided_slice %31 {offsets = [0, 0], sizes = [8, 8], strides = [1, 1]} : vector<8x32xf32> to vector<8x8xf32>
    %39 = vector.extract_strided_slice %33 {offsets = [0, 0], sizes = [8, 8], strides = [1, 1]} : vector<8x32xf32> to vector<8x8xf32>
    %40 = vector.extract_strided_slice %35 {offsets = [0, 0], sizes = [8, 8], strides = [1, 1]} : vector<8x32xf32> to vector<8x8xf32>
    %cst_24 = arith.constant dense<0.000000e+00> : vector<8x8xf32>
    %41 = tpu.matmul %38, %39, %cst_24 {dimension_numbers = #tpu.dot_dimension_numbers<[1], [1], [0], [0], [0, 0, 1, 0], [], []>} : vector<8x8xf32>, vector<8x8xf32>, vector<8x8xf32> -> vector<8x8xf32>
    %cst_25 = arith.constant dense<0xFF800000> : vector<8xf32>
    %42 = vector.multi_reduction <maximumf>, %41, %cst_25 [1] : vector<8x8xf32> to vector<8xf32>
    %43 = vector.shape_cast %42 : vector<8xf32> to vector<8x1xf32>
    %44 = vector.broadcast %43 : vector<8x1xf32> to vector<8x8xf32>
    %45 = arith.subf %41, %44 : vector<8x8xf32>
    %46 = math.exp %45 : vector<8x8xf32>
    %cst_26 = arith.constant dense<0.000000e+00> : vector<8xf32>
    %47 = vector.multi_reduction <add>, %46, %cst_26 [1] : vector<8x8xf32> to vector<8xf32>
    %48 = vector.shape_cast %47 : vector<8xf32> to vector<8x1xf32>
    %49 = vector.broadcast %48 : vector<8x1xf32> to vector<8x8xf32>
    %50 = arith.divf %46, %49 : vector<8x8xf32>
    %cst_27 = arith.constant dense<0.000000e+00> : vector<8x8xf32>
    %51 = tpu.matmul %50, %40, %cst_27 {dimension_numbers = #tpu.dot_dimension_numbers<[1], [0], [0], [1], [0, 0, 1, 1], [], []>} : vector<8x8xf32>, vector<8x8xf32>, vector<8x8xf32> -> vector<8x8xf32>
    %52 = vector.extract_strided_slice %36 {offsets = [0, 0], sizes = [8, 32], strides = [1, 1]} : vector<32x32xf32> to vector<8x32xf32>
    %cst_28 = arith.constant dense<0.000000e+00> : vector<8x32xf32>
    %53 = tpu.matmul %51, %52, %cst_28 {dimension_numbers = #tpu.dot_dimension_numbers<[1], [0], [0], [1], [0, 0, 1, 1], [], []>} : vector<8x8xf32>, vector<8x32xf32>, vector<8x32xf32> -> vector<8x32xf32>
    %54 = arith.addf %37, %53 : vector<8x32xf32>
    %55 = vector.extract_strided_slice %31 {offsets = [0, 8], sizes = [8, 8], strides = [1, 1]} : vector<8x32xf32> to vector<8x8xf32>
    %56 = vector.extract_strided_slice %33 {offsets = [0, 8], sizes = [8, 8], strides = [1, 1]} : vector<8x32xf32> to vector<8x8xf32>
    %57 = vector.extract_strided_slice %35 {offsets = [0, 8], sizes = [8, 8], strides = [1, 1]} : vector<8x32xf32> to vector<8x8xf32>
    %cst_29 = arith.constant dense<0.000000e+00> : vector<8x8xf32>
    %58 = tpu.matmul %55, %56, %cst_29 {dimension_numbers = #tpu.dot_dimension_numbers<[1], [1], [0], [0], [0, 0, 1, 0], [], []>} : vector<8x8xf32>, vector<8x8xf32>, vector<8x8xf32> -> vector<8x8xf32>
    %cst_30 = arith.constant dense<0xFF800000> : vector<8xf32>
    %59 = vector.multi_reduction <maximumf>, %58, %cst_30 [1] : vector<8x8xf32> to vector<8xf32>
    %60 = vector.shape_cast %59 : vector<8xf32> to vector<8x1xf32>
    %61 = vector.broadcast %60 : vector<8x1xf32> to vector<8x8xf32>
    %62 = arith.subf %58, %61 : vector<8x8xf32>
    %63 = math.exp %62 : vector<8x8xf32>
    %cst_31 = arith.constant dense<0.000000e+00> : vector<8xf32>
    %64 = vector.multi_reduction <add>, %63, %cst_31 [1] : vector<8x8xf32> to vector<8xf32>
    %65 = vector.shape_cast %64 : vector<8xf32> to vector<8x1xf32>
    %66 = vector.broadcast %65 : vector<8x1xf32> to vector<8x8xf32>
    %67 = arith.divf %63, %66 : vector<8x8xf32>
    %cst_32 = arith.constant dense<0.000000e+00> : vector<8x8xf32>
    %68 = tpu.matmul %67, %57, %cst_32 {dimension_numbers = #tpu.dot_dimension_numbers<[1], [0], [0], [1], [0, 0, 1, 1], [], []>} : vector<8x8xf32>, vector<8x8xf32>, vector<8x8xf32> -> vector<8x8xf32>
    %69 = vector.extract_strided_slice %36 {offsets = [8, 0], sizes = [8, 32], strides = [1, 1]} : vector<32x32xf32> to vector<8x32xf32>
    %cst_33 = arith.constant dense<0.000000e+00> : vector<8x32xf32>
    %70 = tpu.matmul %68, %69, %cst_33 {dimension_numbers = #tpu.dot_dimension_numbers<[1], [0], [0], [1], [0, 0, 1, 1], [], []>} : vector<8x8xf32>, vector<8x32xf32>, vector<8x32xf32> -> vector<8x32xf32>
    %71 = arith.addf %54, %70 : vector<8x32xf32>
    %72 = vector.extract_strided_slice %31 {offsets = [0, 16], sizes = [8, 8], strides = [1, 1]} : vector<8x32xf32> to vector<8x8xf32>
    %73 = vector.extract_strided_slice %33 {offsets = [0, 16], sizes = [8, 8], strides = [1, 1]} : vector<8x32xf32> to vector<8x8xf32>
    %74 = vector.extract_strided_slice %35 {offsets = [0, 16], sizes = [8, 8], strides = [1, 1]} : vector<8x32xf32> to vector<8x8xf32>
    %cst_34 = arith.constant dense<0.000000e+00> : vector<8x8xf32>
    %75 = tpu.matmul %72, %73, %cst_34 {dimension_numbers = #tpu.dot_dimension_numbers<[1], [1], [0], [0], [0, 0, 1, 0], [], []>} : vector<8x8xf32>, vector<8x8xf32>, vector<8x8xf32> -> vector<8x8xf32>
    %cst_35 = arith.constant dense<0xFF800000> : vector<8xf32>
    %76 = vector.multi_reduction <maximumf>, %75, %cst_35 [1] : vector<8x8xf32> to vector<8xf32>
    %77 = vector.shape_cast %76 : vector<8xf32> to vector<8x1xf32>
    %78 = vector.broadcast %77 : vector<8x1xf32> to vector<8x8xf32>
    %79 = arith.subf %75, %78 : vector<8x8xf32>
    %80 = math.exp %79 : vector<8x8xf32>
    %cst_36 = arith.constant dense<0.000000e+00> : vector<8xf32>
    %81 = vector.multi_reduction <add>, %80, %cst_36 [1] : vector<8x8xf32> to vector<8xf32>
    %82 = vector.shape_cast %81 : vector<8xf32> to vector<8x1xf32>
    %83 = vector.broadcast %82 : vector<8x1xf32> to vector<8x8xf32>
    %84 = arith.divf %80, %83 : vector<8x8xf32>
    %cst_37 = arith.constant dense<0.000000e+00> : vector<8x8xf32>
    %85 = tpu.matmul %84, %74, %cst_37 {dimension_numbers = #tpu.dot_dimension_numbers<[1], [0], [0], [1], [0, 0, 1, 1], [], []>} : vector<8x8xf32>, vector<8x8xf32>, vector<8x8xf32> -> vector<8x8xf32>
    %86 = vector.extract_strided_slice %36 {offsets = [16, 0], sizes = [8, 32], strides = [1, 1]} : vector<32x32xf32> to vector<8x32xf32>
    %cst_38 = arith.constant dense<0.000000e+00> : vector<8x32xf32>
    %87 = tpu.matmul %85, %86, %cst_38 {dimension_numbers = #tpu.dot_dimension_numbers<[1], [0], [0], [1], [0, 0, 1, 1], [], []>} : vector<8x8xf32>, vector<8x32xf32>, vector<8x32xf32> -> vector<8x32xf32>
    %88 = arith.addf %71, %87 : vector<8x32xf32>
    %89 = vector.extract_strided_slice %31 {offsets = [0, 24], sizes = [8, 8], strides = [1, 1]} : vector<8x32xf32> to vector<8x8xf32>
    %90 = vector.extract_strided_slice %33 {offsets = [0, 24], sizes = [8, 8], strides = [1, 1]} : vector<8x32xf32> to vector<8x8xf32>
    %91 = vector.extract_strided_slice %35 {offsets = [0, 24], sizes = [8, 8], strides = [1, 1]} : vector<8x32xf32> to vector<8x8xf32>
    %cst_39 = arith.constant dense<0.000000e+00> : vector<8x8xf32>
    %92 = tpu.matmul %89, %90, %cst_39 {dimension_numbers = #tpu.dot_dimension_numbers<[1], [1], [0], [0], [0, 0, 1, 0], [], []>} : vector<8x8xf32>, vector<8x8xf32>, vector<8x8xf32> -> vector<8x8xf32>
    %cst_40 = arith.constant dense<0xFF800000> : vector<8xf32>
    %93 = vector.multi_reduction <maximumf>, %92, %cst_40 [1] : vector<8x8xf32> to vector<8xf32>
    %94 = vector.shape_cast %93 : vector<8xf32> to vector<8x1xf32>
    %95 = vector.broadcast %94 : vector<8x1xf32> to vector<8x8xf32>
    %96 = arith.subf %92, %95 : vector<8x8xf32>
    %97 = math.exp %96 : vector<8x8xf32>
    %cst_41 = arith.constant dense<0.000000e+00> : vector<8xf32>
    %98 = vector.multi_reduction <add>, %97, %cst_41 [1] : vector<8x8xf32> to vector<8xf32>
    %99 = vector.shape_cast %98 : vector<8xf32> to vector<8x1xf32>
    %100 = vector.broadcast %99 : vector<8x1xf32> to vector<8x8xf32>
    %101 = arith.divf %97, %100 : vector<8x8xf32>
    %cst_42 = arith.constant dense<0.000000e+00> : vector<8x8xf32>
    %102 = tpu.matmul %101, %91, %cst_42 {dimension_numbers = #tpu.dot_dimension_numbers<[1], [0], [0], [1], [0, 0, 1, 1], [], []>} : vector<8x8xf32>, vector<8x8xf32>, vector<8x8xf32> -> vector<8x8xf32>
    %103 = vector.extract_strided_slice %36 {offsets = [24, 0], sizes = [8, 32], strides = [1, 1]} : vector<32x32xf32> to vector<8x32xf32>
    %cst_43 = arith.constant dense<0.000000e+00> : vector<8x32xf32>
    %104 = tpu.matmul %102, %103, %cst_43 {dimension_numbers = #tpu.dot_dimension_numbers<[1], [0], [0], [1], [0, 0, 1, 1], [], []>} : vector<8x8xf32>, vector<8x32xf32>, vector<8x32xf32> -> vector<8x32xf32>
    %105 = arith.addf %88, %104 : vector<8x32xf32>
    %106 = arith.addf %1, %105 : vector<8x32xf32>
    %c0_44 = arith.constant 0 : index
    %c0_45 = arith.constant 0 : index
    %107 = vector.load %arg8[%c0_44, %c0_45] : memref<1x32xf32, #tpu.memory_space<vmem>>, vector<1x32xf32>
    %c0_46 = arith.constant 0 : index
    %c0_47 = arith.constant 0 : index
    %108 = vector.load %arg9[%c0_46, %c0_47] : memref<1x32xf32, #tpu.memory_space<vmem>>, vector<1x32xf32>
    %cst_48 = arith.constant dense<0.000000e+00> : vector<8xf32>
    %109 = vector.multi_reduction <add>, %106, %cst_48 [1] : vector<8x32xf32> to vector<8xf32>
    %110 = vector.shape_cast %109 : vector<8xf32> to vector<8x1xf32>
    %111 = arith.mulf %106, %106 : vector<8x32xf32>
    %cst_49 = arith.constant dense<0.000000e+00> : vector<8xf32>
    %112 = vector.multi_reduction <add>, %111, %cst_49 [1] : vector<8x32xf32> to vector<8xf32>
    %113 = vector.shape_cast %112 : vector<8xf32> to vector<8x1xf32>
    %cst_50 = arith.constant 3.200000e+01 : f32
    %114 = vector.broadcast %cst_50 : f32 to vector<8x1xf32>
    %115 = arith.divf %110, %114 : vector<8x1xf32>
    %cst_51 = arith.constant 3.200000e+01 : f32
    %116 = vector.broadcast %cst_51 : f32 to vector<8x1xf32>
    %117 = arith.divf %113, %116 : vector<8x1xf32>
    %118 = arith.mulf %115, %115 : vector<8x1xf32>
    %119 = arith.subf %117, %118 : vector<8x1xf32>
    %cst_52 = arith.constant 0.000000e+00 : f32
    %120 = vector.broadcast %cst_52 : f32 to vector<8x1xf32>
    %121 = arith.maximumf %119, %120 : vector<8x1xf32>
    %cst_53 = arith.constant 9.99999974E-6 : f32
    %122 = vector.broadcast %cst_53 : f32 to vector<8x1xf32>
    %123 = arith.addf %121, %122 : vector<8x1xf32>
    %124 = math.rsqrt %123 : vector<8x1xf32>
    %125 = vector.broadcast %115 : vector<8x1xf32> to vector<8x32xf32>
    %126 = arith.subf %106, %125 : vector<8x32xf32>
    %127 = vector.broadcast %124 : vector<8x1xf32> to vector<8x32xf32>
    %128 = arith.mulf %126, %127 : vector<8x32xf32>
    %129 = vector.broadcast %107 : vector<1x32xf32> to vector<8x32xf32>
    %130 = arith.mulf %128, %129 : vector<8x32xf32>
    %131 = vector.broadcast %108 : vector<1x32xf32> to vector<8x32xf32>
    %132 = arith.addf %130, %131 : vector<8x32xf32>
    %c0_54 = arith.constant 0 : index
    %c0_55 = arith.constant 0 : index
    %133 = vector.load %arg10[%c0_54, %c0_55] : memref<32x128xf32, #tpu.memory_space<vmem>>, vector<32x128xf32>
    %cst_56 = arith.constant dense<0.000000e+00> : vector<8x128xf32>
    %134 = tpu.matmul %132, %133, %cst_56 {dimension_numbers = #tpu.dot_dimension_numbers<[1], [0], [0], [1], [0, 0, 1, 1], [], []>} : vector<8x32xf32>, vector<32x128xf32>, vector<8x128xf32> -> vector<8x128xf32>
    %c0_57 = arith.constant 0 : index
    %c0_58 = arith.constant 0 : index
    %135 = vector.load %arg11[%c0_57, %c0_58] : memref<1x128xf32, #tpu.memory_space<vmem>>, vector<1x128xf32>
    %136 = vector.broadcast %135 : vector<1x128xf32> to vector<8x128xf32>
    %137 = arith.addf %134, %136 : vector<8x128xf32>
    %cst_59 = arith.constant 0.000000e+00 : f32
    %138 = vector.broadcast %cst_59 : f32 to vector<8x128xf32>
    %139 = arith.maximumf %137, %138 : vector<8x128xf32>
    %c0_60 = arith.constant 0 : index
    %c0_61 = arith.constant 0 : index
    %140 = vector.load %arg12[%c0_60, %c0_61] : memref<128x32xf32, #tpu.memory_space<vmem>>, vector<128x32xf32>
    %cst_62 = arith.constant dense<0.000000e+00> : vector<8x32xf32>
    %141 = tpu.matmul %139, %140, %cst_62 {dimension_numbers = #tpu.dot_dimension_numbers<[1], [0], [0], [1], [0, 0, 1, 1], [], []>} : vector<8x128xf32>, vector<128x32xf32>, vector<8x32xf32> -> vector<8x32xf32>
    %c0_63 = arith.constant 0 : index
    %c0_64 = arith.constant 0 : index
    %142 = vector.load %arg13[%c0_63, %c0_64] : memref<1x32xf32, #tpu.memory_space<vmem>>, vector<1x32xf32>
    %143 = vector.broadcast %142 : vector<1x32xf32> to vector<8x32xf32>
    %144 = arith.addf %141, %143 : vector<8x32xf32>
    %145 = arith.addf %106, %144 : vector<8x32xf32>
    %c0_65 = arith.constant 0 : index
    %c0_66 = arith.constant 0 : index
    %c0_67 = arith.constant 0 : index
    %146 = vector.load %arg14[%c0_65, %c0_66, %c0_67] : memref<1x8x32xf32, #tpu.memory_space<vmem>>, vector<1x8x32xf32>
    %147 = vector.shape_cast %146 : vector<1x8x32xf32> to vector<8x32xf32>
    %148 = vector.shape_cast %145 : vector<8x32xf32> to vector<1x8x32xf32>
    tpu.vector_store %arg14[%c0_65, %c0_66, %c0_67], %148 {strides = array<i32>} : memref<1x8x32xf32, #tpu.memory_space<vmem>>, vector<1x8x32xf32>,
    return
  }
  func.func @transform_0(%arg0: i32) -> (i32, i32, i32) {
    %c0_i32 = arith.constant 0 : i32
    %c0_i32_0 = arith.constant 0 : i32
    %c0_i32_1 = arith.constant 0 : i32
    return %arg0, %c0_i32, %c0_i32_0 : i32, i32, i32
  }
  func.func @transform_1(%arg0: i32) -> (i32, i32) {
    %c0_i32 = arith.constant 0 : i32
    %c0_i32_0 = arith.constant 0 : i32
    %c0_i32_1 = arith.constant 0 : i32
    return %c0_i32, %c0_i32_0 : i32, i32
  }
  func.func @transform_2(%arg0: i32) -> (i32, i32) {
    %c0_i32 = arith.constant 0 : i32
    %c0_i32_0 = arith.constant 0 : i32
    %c0_i32_1 = arith.constant 0 : i32
    return %c0_i32, %c0_i32_0 : i32, i32
  }
  func.func @transform_3(%arg0: i32) -> (i32, i32) {
    %c0_i32 = arith.constant 0 : i32
    %c0_i32_0 = arith.constant 0 : i32
    %c0_i32_1 = arith.constant 0 : i32
    return %c0_i32, %c0_i32_0 : i32, i32
  }
  func.func @transform_4(%arg0: i32) -> (i32, i32) {
    %c0_i32 = arith.constant 0 : i32
    %c0_i32_0 = arith.constant 0 : i32
    %c0_i32_1 = arith.constant 0 : i32
    return %c0_i32, %c0_i32_0 : i32, i32
  }
  func.func @transform_5(%arg0: i32) -> (i32, i32) {
    %c0_i32 = arith.constant 0 : i32
    %c0_i32_0 = arith.constant 0 : i32
    %c0_i32_1 = arith.constant 0 : i32
    return %c0_i32, %c0_i32_0 : i32, i32
  }
  func.func @transform_6(%arg0: i32) -> (i32, i32) {
    %c0_i32 = arith.constant 0 : i32
    %c0_i32_0 = arith.constant 0 : i32
    %c0_i32_1 = arith.constant 0 : i32
    return %c0_i32, %c0_i32_0 : i32, i32
  }
  func.func @transform_7(%arg0: i32) -> (i32, i32) {
    %c0_i32 = arith.constant 0 : i32
    %c0_i32_0 = arith.constant 0 : i32
    %c0_i32_1 = arith.constant 0 : i32
    return %c0_i32, %c0_i32_0 : i32, i32
  }
  func.func @transform_8(%arg0: i32) -> (i32, i32) {
    %c0_i32 = arith.constant 0 : i32
    %c0_i32_0 = arith.constant 0 : i32
    %c0_i32_1 = arith.constant 0 : i32
    return %c0_i32, %c0_i32_0 : i32, i32
  }
  func.func @transform_9(%arg0: i32) -> (i32, i32) {
    %c0_i32 = arith.constant 0 : i32
    %c0_i32_0 = arith.constant 0 : i32
    %c0_i32_1 = arith.constant 0 : i32
    return %c0_i32, %c0_i32_0 : i32, i32
  }
  func.func @transform_10(%arg0: i32) -> (i32, i32) {
    %c0_i32 = arith.constant 0 : i32
    %c0_i32_0 = arith.constant 0 : i32
    %c0_i32_1 = arith.constant 0 : i32
    return %c0_i32, %c0_i32_0 : i32, i32
  }
  func.func @transform_11(%arg0: i32) -> (i32, i32) {
    %c0_i32 = arith.constant 0 : i32
    %c0_i32_0 = arith.constant 0 : i32
    %c0_i32_1 = arith.constant 0 : i32
    return %c0_i32, %c0_i32_0 : i32, i32
  }
  func.func @transform_12(%arg0: i32) -> (i32, i32) {
    %c0_i32 = arith.constant 0 : i32
    %c0_i32_0 = arith.constant 0 : i32
    %c0_i32_1 = arith.constant 0 : i32
    return %c0_i32, %c0_i32_0 : i32, i32
  }
  func.func @transform_13(%arg0: i32) -> (i32, i32, i32) {
    %c0_i32 = arith.constant 0 : i32
    %c0_i32_0 = arith.constant 0 : i32
    %c0_i32_1 = arith.constant 0 : i32
    return %arg0, %c0_i32, %c0_i32_0 : i32, i32, i32
  }
}

</mosaic_0001>

<llo_original>
// kernel: transformer_encoder_block_forward.1
$region0: #{transformer_encoder_block_forward.1}
  #allocation0 [shape = 'u32[]', space=smem, size = 0x4, offset = 0x4, fixed_abs, tag = 'smem constant byte address 0x4 - core index']
  #allocation1 [shape = 'u32[72,128]{1,0:T(1,128)}', space=vmem, size = 0x9000, scoped, tag = 'internal scratch']
  %s0 = inlined_call_operand.vmem [shape: f32[2,8,32], index: 0, kind: input, shape index: {}]
  %s1 = inlined_call_operand.vmem [shape: f32[1,32], index: 1, kind: input, shape index: {}]
  %s2 = inlined_call_operand.vmem [shape: f32[1,32], index: 2, kind: input, shape index: {}]
  %s3 = inlined_call_operand.vmem [shape: f32[32,32], index: 3, kind: input, shape index: {}]
  %s4 = inlined_call_operand.vmem [shape: f32[32,32], index: 4, kind: input, shape index: {}]
  %s5 = inlined_call_operand.vmem [shape: f32[32,32], index: 5, kind: input, shape index: {}]
  %s6 = inlined_call_operand.vmem [shape: f32[32,32], index: 6, kind: input, shape index: {}]
  %s7 = inlined_call_operand.vmem [shape: f32[1,32], index: 7, kind: input, shape index: {}]
  %s8 = inlined_call_operand.vmem [shape: f32[1,32], index: 8, kind: input, shape index: {}]
  %s9 = inlined_call_operand.vmem [shape: f32[32,128], index: 9, kind: input, shape index: {}]
  %s10 = inlined_call_operand.vmem [shape: f32[1,128], index: 10, kind: input, shape index: {}]
  %s11 = inlined_call_operand.vmem [shape: f32[128,32], index: 11, kind: input, shape index: {}]
  %s12 = inlined_call_operand.vmem [shape: f32[1,32], index: 12, kind: input, shape index: {}]
  %s13 = inlined_call_operand.hbm [shape: f32[2,8,32], index: 13, kind: output, shape index: {}]
  %s14 = sld [smem:[#allocation0]]
  $region85: #{transformer_encoder_block_forward.1} parent=0
    _
  %s16 = ssub.s32 1, %s14
  %s17 = scalar_select 0, %s16, %s14
  $region1: #{transformer_encoder_block_forward.1} parent=0
    #allocation2 [shape = 'u8[8192]{0}', space=vmem, size = 0x2000, scoped, tag = 'output window, operand 0']
    #allocation3 [shape = 's32[2]{0}', space=sflag, size = 0x8, scoped, tag = 'scoped memory for transformer_encoder_block_forward.1']
    %18 = vsyncpa [#allocation3], 0
    %s19 = scalar_lea.sflag [#allocation3], 1
    %20 = vsyncpa %s19, 0
    loop: start=0, step=1, limit=4
    $region2: #{transformer_encoder_block_forward.1} parent=1 // loop_pre_header
      _
    $region3: #{transformer_encoder_block_forward.1} parent=1 // loop_header
      %s22 = sphi 0, %s26
      %p23 = scmp.ge.s32.totalorder %s22, 4
      %s32 = sphi 0, %s34
      %s35 = sphi 0, %s32
      %s36 = sphi 0, %s35
      %s52 = sphi 0, %s36
      %s56 = sphi 0, %s56
      %s58 = sphi 0, %s56
      %s59 = sphi 0, %s58
      %s73 = sphi 0, %s59
      %s77 = sphi 0, %s77
      %s79 = sphi 0, %s77
      %s80 = sphi 0, %s79
      %s94 = sphi 0, %s80
      %s98 = sphi 0, %s98
      %s100 = sphi 0, %s98
      %s101 = sphi 0, %s100
      %s115 = sphi 0, %s101
      %s119 = sphi 0, %s119
      %s121 = sphi 0, %s119
      %s122 = sphi 0, %s121
      %s136 = sphi 0, %s122
      %s140 = sphi 0, %s140
      %s142 = sphi 0, %s140
      %s143 = sphi 0, %s142
      %s157 = sphi 0, %s143
      %s161 = sphi 0, %s161
      %s163 = sphi 0, %s161
      %s164 = sphi 0, %s163
      %s178 = sphi 0, %s164
      %s182 = sphi 0, %s182
      %s184 = sphi 0, %s182
      %s185 = sphi 0, %s184
      %s199 = sphi 0, %s185
      %s203 = sphi 0, %s203
      %s205 = sphi 0, %s203
      %s206 = sphi 0, %s205
      %s220 = sphi 0, %s206
      %s224 = sphi 0, %s224
      %s226 = sphi 0, %s224
      %s227 = sphi 0, %s226
      %s241 = sphi 0, %s227
      %s245 = sphi 0, %s245
      %s247 = sphi 0, %s245
      %s248 = sphi 0, %s247
      %s262 = sphi 0, %s248
      %s266 = sphi 0, %s266
      %s268 = sphi 0, %s266
      %s269 = sphi 0, %s268
      %s283 = sphi 0, %s269
      %s287 = sphi 0, %s287
      %s289 = sphi 0, %s287
      %s290 = sphi 0, %s289
      %s304 = sphi 0, %s290
      %s310 = sphi 0, %s312
      %s313 = sphi 0, %s310
      %s314 = sphi 0, %s313
      %s330 = sphi 0, %s314
    $region4: #{transformer_encoder_block_forward.1} parent=1 // loop_header_branch
      %25 = sbr.rel (%p23) target = $region8
    $region5: #{transformer_encoder_block_forward.1} parent=1 // loop_body
      %s27 = ssub.s32 %s22, 1
      %s28 = ssub.s32 %s22, 2
      %s29 = sadd.s32 %s22, 1
      %s30 = ssub.s32 %s22, %s29
      %p31 = scmp.eq.s32.totalorder %s30, 0
      %s33 = sadd.s32 %s32, 1
      %s34 = scalar_select %p31, %s32, %s33
      %p37 = pneg %p31
      %p38 = scmp.eq.s32.totalorder %s22, 1
      %p39 = por %p37, %p38
      %p40 = scmp.ne.s32.totalorder %s32, %s35
      %p41 = scmp.eq.s32.totalorder %s22, 0
      %p42 = por %p40, %p41
      %p43 = scmp.ne.s32.totalorder %s32, %s35
      %p44 = scmp.eq.s32.totalorder %s27, 1
      %p45 = por %p43, %p44
      %p46 = scmp.ne.s32.totalorder %s35, %s36
      %p47 = scmp.eq.s32.totalorder %s27, 0
      %p48 = por %p46, %p47
      %p49 = scmp.ne.s32.totalorder %s35, %s36
      %p50 = scmp.eq.s32.totalorder %s28, 1
      %p51 = por %p49, %p50
      %p53 = scmp.ne.s32.totalorder %s36, %s52
      %p54 = scmp.eq.s32.totalorder %s28, 0
      %p55 = por %p53, %p54
      %s57 = sadd.s32 %s56, 1
      %p60 = scmp.eq.s32.totalorder %s22, 1
      %p61 = scmp.ne.s32.totalorder %s56, %s58
      %p62 = scmp.eq.s32.totalorder %s22, 0
      %p63 = por %p61, %p62
      %p64 = scmp.ne.s32.totalorder %s56, %s58
      %p65 = scmp.eq.s32.totalorder %s27, 1
      %p66 = por %p64, %p65
      %p67 = scmp.ne.s32.totalorder %s58, %s59
      %p68 = scmp.eq.s32.totalorder %s27, 0
      %p69 = por %p67, %p68
      %p70 = scmp.ne.s32.totalorder %s58, %s59
      %p71 = scmp.eq.s32.totalorder %s28, 1
      %p72 = por %p70, %p71
      %p74 = scmp.ne.s32.totalorder %s59, %s73
      %p75 = scmp.eq.s32.totalorder %s28, 0
      %p76 = por %p74, %p75
      %s78 = sadd.s32 %s77, 1
      %p81 = scmp.eq.s32.totalorder %s22, 1
      %p82 = scmp.ne.s32.totalorder %s77, %s79
      %p83 = scmp.eq.s32.totalorder %s22, 0
      %p84 = por %p82, %p83
      %p85 = scmp.ne.s32.totalorder %s77, %s79
      %p86 = scmp.eq.s32.totalorder %s27, 1
      %p87 = por %p85, %p86
      %p88 = scmp.ne.s32.totalorder %s79, %s80
      %p89 = scmp.eq.s32.totalorder %s27, 0
      %p90 = por %p88, %p89
      %p91 = scmp.ne.s32.totalorder %s79, %s80
      %p92 = scmp.eq.s32.totalorder %s28, 1
      %p93 = por %p91, %p92
      %p95 = scmp.ne.s32.totalorder %s80, %s94
      %p96 = scmp.eq.s32.totalorder %s28, 0
      %p97 = por %p95, %p96
      %s99 = sadd.s32 %s98, 1
      %p102 = scmp.eq.s32.totalorder %s22, 1
      %p103 = scmp.ne.s32.totalorder %s98, %s100
      %p104 = scmp.eq.s32.totalorder %s22, 0
      %p105 = por %p103, %p104
      %p106 = scmp.ne.s32.totalorder %s98, %s100
      %p107 = scmp.eq.s32.totalorder %s27, 1
      %p108 = por %p106, %p107
      %p109 = scmp.ne.s32.totalorder %s100, %s101
      %p110 = scmp.eq.s32.totalorder %s27, 0
      %p111 = por %p109, %p110
      %p112 = scmp.ne.s32.totalorder %s100, %s101
      %p113 = scmp.eq.s32.totalorder %s28, 1
      %p114 = por %p112, %p113
      %p116 = scmp.ne.s32.totalorder %s101, %s115
      %p117 = scmp.eq.s32.totalorder %s28, 0
      %p118 = por %p116, %p117
      %s120 = sadd.s32 %s119, 1
      %p123 = scmp.eq.s32.totalorder %s22, 1
      %p124 = scmp.ne.s32.totalorder %s119, %s121
      %p125 = scmp.eq.s32.totalorder %s22, 0
      %p126 = por %p124, %p125
      %p127 = scmp.ne.s32.totalorder %s119, %s121
      %p128 = scmp.eq.s32.totalorder %s27, 1
      %p129 = por %p127, %p128
      %p130 = scmp.ne.s32.totalorder %s121, %s122
      %p131 = scmp.eq.s32.totalorder %s27, 0
      %p132 = por %p130, %p131
      %p133 = scmp.ne.s32.totalorder %s121, %s122
      %p134 = scmp.eq.s32.totalorder %s28, 1
      %p135 = por %p133, %p134
      %p137 = scmp.ne.s32.totalorder %s122, %s136
      %p138 = scmp.eq.s32.totalorder %s28, 0
      %p139 = por %p137, %p138
      %s141 = sadd.s32 %s140, 1
      %p144 = scmp.eq.s32.totalorder %s22, 1
      %p145 = scmp.ne.s32.totalorder %s140, %s142
      %p146 = scmp.eq.s32.totalorder %s22, 0
      %p147 = por %p145, %p146
      %p148 = scmp.ne.s32.totalorder %s140, %s142
      %p149 = scmp.eq.s32.totalorder %s27, 1
      %p150 = por %p148, %p149
      %p151 = scmp.ne.s32.totalorder %s142, %s143
      %p152 = scmp.eq.s32.totalorder %s27, 0
      %p153 = por %p151, %p152
      %p154 = scmp.ne.s32.totalorder %s142, %s143
      %p155 = scmp.eq.s32.totalorder %s28, 1
      %p156 = por %p154, %p155
      %p158 = scmp.ne.s32.totalorder %s143, %s157
      %p159 = scmp.eq.s32.totalorder %s28, 0
      %p160 = por %p158, %p159
      %s162 = sadd.s32 %s161, 1
      %p165 = scmp.eq.s32.totalorder %s22, 1
      %p166 = scmp.ne.s32.totalorder %s161, %s163
      %p167 = scmp.eq.s32.totalorder %s22, 0
      %p168 = por %p166, %p167
      %p169 = scmp.ne.s32.totalorder %s161, %s163
      %p170 = scmp.eq.s32.totalorder %s27, 1
      %p171 = por %p169, %p170
      %p172 = scmp.ne.s32.totalorder %s163, %s164
      %p173 = scmp.eq.s32.totalorder %s27, 0
      %p174 = por %p172, %p173
      %p175 = scmp.ne.s32.totalorder %s163, %s164
      %p176 = scmp.eq.s32.totalorder %s28, 1
      %p177 = por %p175, %p176
      %p179 = scmp.ne.s32.totalorder %s164, %s178
      %p180 = scmp.eq.s32.totalorder %s28, 0
      %p181 = por %p179, %p180
      %s183 = sadd.s32 %s182, 1
      %p186 = scmp.eq.s32.totalorder %s22, 1
      %p187 = scmp.ne.s32.totalorder %s182, %s184
      %p188 = scmp.eq.s32.totalorder %s22, 0
      %p189 = por %p187, %p188
      %p190 = scmp.ne.s32.totalorder %s182, %s184
      %p191 = scmp.eq.s32.totalorder %s27, 1
      %p192 = por %p190, %p191
      %p193 = scmp.ne.s32.totalorder %s184, %s185
      %p194 = scmp.eq.s32.totalorder %s27, 0
      %p195 = por %p193, %p194
      %p196 = scmp.ne.s32.totalorder %s184, %s185
      %p197 = scmp.eq.s32.totalorder %s28, 1
      %p198 = por %p196, %p197
      %p200 = scmp.ne.s32.totalorder %s185, %s199
      %p201 = scmp.eq.s32.totalorder %s28, 0
      %p202 = por %p200, %p201
      %s204 = sadd.s32 %s203, 1
      %p207 = scmp.eq.s32.totalorder %s22, 1
      %p208 = scmp.ne.s32.totalorder %s203, %s205
      %p209 = scmp.eq.s32.totalorder %s22, 0
      %p210 = por %p208, %p209
      %p211 = scmp.ne.s32.totalorder %s203, %s205
      %p212 = scmp.eq.s32.totalorder %s27, 1
      %p213 = por %p211, %p212
      %p214 = scmp.ne.s32.totalorder %s205, %s206
      %p215 = scmp.eq.s32.totalorder %s27, 0
      %p216 = por %p214, %p215
      %p217 = scmp.ne.s32.totalorder %s205, %s206
      %p218 = scmp.eq.s32.totalorder %s28, 1
      %p219 = por %p217, %p218
      %p221 = scmp.ne.s32.totalorder %s206, %s220
      %p222 = scmp.eq.s32.totalorder %s28, 0
      %p223 = por %p221, %p222
      %s225 = sadd.s32 %s224, 1
      %p228 = scmp.eq.s32.totalorder %s22, 1
      %p229 = scmp.ne.s32.totalorder %s224, %s226
      %p230 = scmp.eq.s32.totalorder %s22, 0
      %p231 = por %p229, %p230
      %p232 = scmp.ne.s32.totalorder %s224, %s226
      %p233 = scmp.eq.s32.totalorder %s27, 1
      %p234 = por %p232, %p233
      %p235 = scmp.ne.s32.totalorder %s226, %s227
      %p236 = scmp.eq.s32.totalorder %s27, 0
      %p237 = por %p235, %p236
      %p238 = scmp.ne.s32.totalorder %s226, %s227
      %p239 = scmp.eq.s32.totalorder %s28, 1
      %p240 = por %p238, %p239
      %p242 = scmp.ne.s32.totalorder %s227, %s241
      %p243 = scmp.eq.s32.totalorder %s28, 0
      %p244 = por %p242, %p243
      %s246 = sadd.s32 %s245, 1
      %p249 = scmp.eq.s32.totalorder %s22, 1
      %p250 = scmp.ne.s32.totalorder %s245, %s247
      %p251 = scmp.eq.s32.totalorder %s22, 0
      %p252 = por %p250, %p251
      %p253 = scmp.ne.s32.totalorder %s245, %s247
      %p254 = scmp.eq.s32.totalorder %s27, 1
      %p255 = por %p253, %p254
      %p256 = scmp.ne.s32.totalorder %s247, %s248
      %p257 = scmp.eq.s32.totalorder %s27, 0
      %p258 = por %p256, %p257
      %p259 = scmp.ne.s32.totalorder %s247, %s248
      %p260 = scmp.eq.s32.totalorder %s28, 1
      %p261 = por %p259, %p260
      %p263 = scmp.ne.s32.totalorder %s248, %s262
      %p264 = scmp.eq.s32.totalorder %s28, 0
      %p265 = por %p263, %p264
      %s267 = sadd.s32 %s266, 1
      %p270 = scmp.eq.s32.totalorder %s22, 1
      %p271 = scmp.ne.s32.totalorder %s266, %s268
      %p272 = scmp.eq.s32.totalorder %s22, 0
      %p273 = por %p271, %p272
      %p274 = scmp.ne.s32.totalorder %s266, %s268
      %p275 = scmp.eq.s32.totalorder %s27, 1
      %p276 = por %p274, %p275
      %p277 = scmp.ne.s32.totalorder %s268, %s269
      %p278 = scmp.eq.s32.totalorder %s27, 0
      %p279 = por %p277, %p278
      %p280 = scmp.ne.s32.totalorder %s268, %s269
      %p281 = scmp.eq.s32.totalorder %s28, 1
      %p282 = por %p280, %p281
      %p284 = scmp.ne.s32.totalorder %s269, %s283
      %p285 = scmp.eq.s32.totalorder %s28, 0
      %p286 = por %p284, %p285
      %s288 = sadd.s32 %s287, 1
      %p291 = scmp.eq.s32.totalorder %s22, 1
      %p292 = scmp.ne.s32.totalorder %s287, %s289
      %p293 = scmp.eq.s32.totalorder %s22, 0
      %p294 = por %p292, %p293
      %p295 = scmp.ne.s32.totalorder %s287, %s289
      %p296 = scmp.eq.s32.totalorder %s27, 1
      %p297 = por %p295, %p296
      %p298 = scmp.ne.s32.totalorder %s289, %s290
      %p299 = scmp.eq.s32.totalorder %s27, 0
      %p300 = por %p298, %p299
      %p301 = scmp.ne.s32.totalorder %s289, %s290
      %p302 = scmp.eq.s32.totalorder %s28, 1
      %p303 = por %p301, %p302
      %p305 = scmp.ne.s32.totalorder %s290, %s304
      %p306 = scmp.eq.s32.totalorder %s28, 0
      %p307 = por %p305, %p306
      %s308 = ssub.s32 %s22, %s29
      %p309 = scmp.eq.s32.totalorder %s308, 0
      %s311 = sadd.s32 %s310, 1
      %s312 = scalar_select %p309, %s310, %s311
      %p315 = pneg %p309
      %p316 = scmp.eq.s32.totalorder %s22, 1
      %p317 = por %p315, %p316
      %p318 = scmp.ne.s32.totalorder %s310, %s313
      %p319 = scmp.eq.s32.totalorder %s22, 0
      %p320 = por %p318, %p319
      %p321 = scmp.ne.s32.totalorder %s310, %s313
      %p322 = scmp.eq.s32.totalorder %s27, 1
      %p323 = por %p321, %p322
      %p324 = scmp.ne.s32.totalorder %s313, %s314
      %p325 = scmp.eq.s32.totalorder %s27, 0
      %p326 = por %p324, %p325
      %p327 = scmp.ne.s32.totalorder %s313, %s314
      %p328 = scmp.eq.s32.totalorder %s28, 1
      %p329 = por %p327, %p328
      %p331 = scmp.ne.s32.totalorder %s314, %s330
      %p332 = scmp.eq.s32.totalorder %s28, 0
      %p333 = por %p331, %p332
      %p334 = scmp.le.s32.totalorder 1, %s22
      %p335 = scmp.lt.s32.totalorder %s22, 3
      %p336 = pnand %p334, %p335
      %p337 = pneg %p336
      // Predicated region
      $region9: #{transformer_encoder_block_forward.1} parent=5 // pred_check
        _
      $region10: #{transformer_encoder_block_forward.1} parent=5 // pred_check_branch
        %339 = sbr.rel (%p336) target = $region12
      $region11: #{transformer_encoder_block_forward.1} parent=5 // pred_region
        %s340 = ssub.s32 %s22, 1
        // Predicated region
        $region13: #{transformer_encoder_block_forward.1} parent=11 // pred_check
          %p341 = pneg %p69
        $region14: #{transformer_encoder_block_forward.1} parent=11 // pred_check_branch
          %343 = sbr.rel (%p341) target = $region16
        $region15: #{transformer_encoder_block_forward.1} parent=11 // pred_region
          _
        $region16: #{transformer_encoder_block_forward.1} parent=11 // pred_fallthru
          _
        // Predicated region
        $region17: #{transformer_encoder_block_forward.1} parent=11 // pred_check
          %p344 = pneg %p90
        $region18: #{transformer_encoder_block_forward.1} parent=11 // pred_check_branch
          %346 = sbr.rel (%p344) target = $region20
        $region19: #{transformer_encoder_block_forward.1} parent=11 // pred_region
          _
        $region20: #{transformer_encoder_block_forward.1} parent=11 // pred_fallthru
          _
        // Predicated region
        $region21: #{transformer_encoder_block_forward.1} parent=11 // pred_check
          %p347 = pneg %p111
        $region22: #{transformer_encoder_block_forward.1} parent=11 // pred_check_branch
          %349 = sbr.rel (%p347) target = $region24
        $region23: #{transformer_encoder_block_forward.1} parent=11 // pred_region
          _
        $region24: #{transformer_encoder_block_forward.1} parent=11 // pred_fallthru
          _
        // Predicated region
        $region25: #{transformer_encoder_block_forward.1} parent=11 // pred_check
          %p350 = pneg %p132
        $region26: #{transformer_encoder_block_forward.1} parent=11 // pred_check_branch
          %352 = sbr.rel (%p350) target = $region28
        $region27: #{transformer_encoder_block_forward.1} parent=11 // pred_region
          _
        $region28: #{transformer_encoder_block_forward.1} parent=11 // pred_fallthru
          _
        // Predicated region
        $region29: #{transformer_encoder_block_forward.1} parent=11 // pred_check
          %p353 = pneg %p153
        $region30: #{transformer_encoder_block_forward.1} parent=11 // pred_check_branch
          %355 = sbr.rel (%p353) target = $region32
        $region31: #{transformer_encoder_block_forward.1} parent=11 // pred_region
          _
        $region32: #{transformer_encoder_block_forward.1} parent=11 // pred_fallthru
          _
        // Predicated region
        $region33: #{transformer_encoder_block_forward.1} parent=11 // pred_check
          %p356 = pneg %p174
        $region34: #{transformer_encoder_block_forward.1} parent=11 // pred_check_branch
          %358 = sbr.rel (%p356) target = $region36
        $region35: #{transformer_encoder_block_forward.1} parent=11 // pred_region
          _
        $region36: #{transformer_encoder_block_forward.1} parent=11 // pred_fallthru
          _
        // Predicated region
        $region37: #{transformer_encoder_block_forward.1} parent=11 // pred_check
          %p359 = pneg %p195
        $region38: #{transformer_encoder_block_forward.1} parent=11 // pred_check_branch
          %361 = sbr.rel (%p359) target = $region40
        $region39: #{transformer_encoder_block_forward.1} parent=11 // pred_region
          _
        $region40: #{transformer_encoder_block_forward.1} parent=11 // pred_fallthru
          _
        // Predicated region
        $region41: #{transformer_encoder_block_forward.1} parent=11 // pred_check
          %p362 = pneg %p216
        $region42: #{transformer_encoder_block_forward.1} parent=11 // pred_check_branch
          %364 = sbr.rel (%p362) target = $region44
        $region43: #{transformer_encoder_block_forward.1} parent=11 // pred_region
          _
        $region44: #{transformer_encoder_block_forward.1} parent=11 // pred_fallthru
          _
        // Predicated region
        $region45: #{transformer_encoder_block_forward.1} parent=11 // pred_check
          %p365 = pneg %p237
        $region46: #{transformer_encoder_block_forward.1} parent=11 // pred_check_branch
          %367 = sbr.rel (%p365) target = $region48
        $region47: #{transformer_encoder_block_forward.1} parent=11 // pred_region
          _
        $region48: #{transformer_encoder_block_forward.1} parent=11 // pred_fallthru
          _
        // Predicated region
        $region49: #{transformer_encoder_block_forward.1} parent=11 // pred_check
          %p368 = pneg %p258
        $region50: #{transformer_encoder_block_forward.1} parent=11 // pred_check_branch
          %370 = sbr.rel (%p368) target = $region52
        $region51: #{transformer_encoder_block_forward.1} parent=11 // pred_region
          _
        $region52: #{transformer_encoder_block_forward.1} parent=11 // pred_fallthru
          _
        // Predicated region
        $region53: #{transformer_encoder_block_forward.1} parent=11 // pred_check
          %p371 = pneg %p279
        $region54: #{transformer_encoder_block_forward.1} parent=11 // pred_check_branch
          %373 = sbr.rel (%p371) target = $region56
        $region55: #{transformer_encoder_block_forward.1} parent=11 // pred_region
          _
        $region56: #{transformer_encoder_block_forward.1} parent=11 // pred_fallthru
          _
        // Predicated region
        $region57: #{transformer_encoder_block_forward.1} parent=11 // pred_check
          %p374 = pneg %p300
        $region58: #{transformer_encoder_block_forward.1} parent=11 // pred_check_branch
          %376 = sbr.rel (%p374) target = $region60
        $region59: #{transformer_encoder_block_forward.1} parent=11 // pred_region
          _
        $region60: #{transformer_encoder_block_forward.1} parent=11 // pred_fallthru
          _
      $region12: #{transformer_encoder_block_forward.1} parent=5 // pred_fallthru
        _
      %p377 = scmp.lt.s32.totalorder %s22, 2
      // Predicated region
      $region61: #{transformer_encoder_block_forward.1} parent=5 // pred_check
        %p378 = pneg %p377
      $region62: #{transformer_encoder_block_forward.1} parent=5 // pred_check_branch
        %380 = sbr.rel (%p378) target = $region64
      $region63: #{transformer_encoder_block_forward.1} parent=5 // pred_region
        // Predicated region
        $region65: #{transformer_encoder_block_forward.1} parent=63 // pred_check
          %p381 = pneg %p42
        $region66: #{transformer_encoder_block_forward.1} parent=63 // pred_check_branch
          %383 = sbr.rel (%p381) target = $region68
        $region67: #{transformer_encoder_block_forward.1} parent=63 // pred_region
          %p384 = scmp.lt.s32.totalorder %s22, 1
          %s385 = scalar_select %p384, %s22, 1
          %s386 = smul.addr %s385, 8
          %s387 = scalar_lea.vmem %s0, %s386
        $region68: #{transformer_encoder_block_forward.1} parent=63 // pred_fallthru
          _
      $region64: #{transformer_encoder_block_forward.1} parent=5 // pred_fallthru
        _
      %p388 = scmp.le.s32.totalorder 1, %s22
      %p389 = scmp.lt.s32.totalorder %s22, 3
      %p390 = pnand %p388, %p389
      %p391 = pneg %p390
      // Predicated region
      $region69: #{transformer_encoder_block_forward.1} parent=5 // pred_check
        _
      $region70: #{transformer_encoder_block_forward.1} parent=5 // pred_check_branch
        %393 = sbr.rel (%p390) target = $region72
      $region71: #{transformer_encoder_block_forward.1} parent=5 // pred_region
        %s394 = ssub.s32 %s22, 1
        %p395 = scmp.lt.s32.totalorder %s27, 1
        %s396 = scalar_select %p395, %s27, 1
        %s397 = smul.addr %s396, 8
        %s398 = scalar_lea.vmem %s0, %s397
        %p399 = pneg %p48
        %p400 = pneg %p45
        %p401 = pneg %p69
        %p402 = pneg %p66
        %p403 = pneg %p90
        %p404 = pneg %p87
        %p405 = pneg %p111
        %p406 = pneg %p108
        %p407 = pneg %p132
        %p408 = pneg %p129
        %p409 = pneg %p153
        %p410 = pneg %p150
        %p411 = pneg %p174
        %p412 = pneg %p171
        %p413 = pneg %p195
        %p414 = pneg %p192
        %p415 = pneg %p216
        %p416 = pneg %p213
        %p417 = pneg %p237
        %p418 = pneg %p234
        %p419 = pneg %p258
        %p420 = pneg %p255
        %p421 = pneg %p279
        %p422 = pneg %p276
        %p423 = pneg %p300
        %p424 = pneg %p297
        %p425 = pneg %p326
        %p426 = pneg %p323
        %s427 = sand.u32 %s313, 1
        %s428 = scalar_lea.sflag [#allocation3], %s427
        %s429 = sand.u32 %s313, 1
        %s430 = smul.addr %s429, 8
        %s431 = scalar_lea.vmem [#allocation2], %s430
        %p432 = scmp.lt.s32.totalorder %s27, 1
        %s433 = scalar_select %p432, %s27, 1
        %s434 = smul.addr %s433, 8
        %s435 = scalar_lea.vmem %s0, %s434
        %v436 = vld [vmem:[%s435] sm:$0xff]
        %v437 = vld [vmem:[%s1] sm:$0x1]
        %v438 = vld [vmem:[%s2] sm:$0x1]
        %vm439 = vcmask 261120
        %v440 = vsel %vm439, %v436, 0.0
        %441 = vadd.xlane.f32.xlu0 %v440
        %v442 = vpop.xlane.xlu0 %441
        %v443 = vmul.f32 %v436, %v436
        %v444 = vsel %vm439, %v443, 0.0
        %445 = vadd.xlane.f32.xlu0 %v444
        %v446 = vpop.xlane.xlu0 %445
        %v447 = vrcp.pop 32.0
        %v448 = vmul.f32 32.0, %v447
        %v449 = vsub.f32 1.0, %v448
        %v450 = vmul.f32 %v447, %v449
        %v451 = vadd.f32 %v447, %v450
        %vm452 = vweird.f32 %v447
        %v453 = vsel %vm452, %v447, %v451
        %v454 = vmul.f32 %v442, %v453
        %v455 = vmul.f32 %v446, %v453
        %v456 = vmul.f32 %v454, %v454
        %v457 = vsub.f32 %v455, %v456
        %v458 = vmax.f32 %v457, 0.0
        %v459 = vadd.f32 %v458, 1e-05
        %v460 = vrsqrt.pop %v459
        %v461 = vmul.f32 %v460, %v459
        %v462 = vmul.f32 %v461, %v460
        %v463 = vmul.f32 0.5, %v462
        %v464 = vsub.f32 1.5, %v463
        %v465 = vmul.f32 %v460, %v464
        %vm466 = vweird.f32 %v459
        %vm467 = vweird.f32 %v460
        %vm468 = vmor %vm466, %vm467
        %v469 = vsel %vm468, %v460, %v465
        %v470 = vsub.f32 %v436, %v454
        %v471 = vmul.f32 %v470, %v469
        %v473 = vperm.slane %v437, 0
        %v475 = vmul.f32 %v471, %v473
        %v477 = vperm.slane %v438, 0
        %v479 = vadd.f32 %v475, %v477
        %v480 = vld [vmem:[%s3] sm:$0xff]
        %v481 = vld [vmem:[%s3 + $0x8] sm:$0xff]
        %v482 = vld [vmem:[%s3 + $0x10] sm:$0xff]
        %v483 = vld [vmem:[%s3 + $0x18] sm:$0xff]
        %v485 = vsel %vm439, %v479, 0
        %487 = vmatpush.msra.mxu0 0.0
        %488 = vmatpush.msra.mxu0 0.0
        %489 = vmatpush.msra.mxu0 0.0
        %490 = vmatpush.msra.mxu0 0.0
        %491 = vmatpush.msra.mxu0 0.0
        %492 = vmatpush.msra.mxu0 0.0
        %493 = vmatpush.msra.mxu0 0.0
        %494 = vmatpush.msra.mxu0 0.0
        %495 = vmatpush.msra.mxu0 0.0
        %496 = vmatpush.msra.mxu0 0.0
        %497 = vmatpush.msra.mxu0 0.0
        %498 = vmatpush.msra.mxu0 0.0
        %499 = vmatpush.msra.mxu0 %v483
        %500 = vmatpush.msra.mxu0 %v482
        %501 = vmatpush.msra.mxu0 %v481
        %502 = vmatpush.msra.mxu0 %v480
        %503 = vmatmul.f32.gmra.mxu0 %v485
        %v504 = vpop.f32.mrf.mxu0
        %v505 = vadd.f32 0.0, %v504
        %506 = vdwg.mxu0
        %v507 = vmul.f32 %v505, 0.35355338
        %v508 = vld [vmem:[%s4] sm:$0xff]
        %v509 = vld [vmem:[%s4 + $0x8] sm:$0xff]
        %v510 = vld [vmem:[%s4 + $0x10] sm:$0xff]
        %v511 = vld [vmem:[%s4 + $0x18] sm:$0xff]
        %512 = vmatpush.msra.mxu0 0.0
        %513 = vmatpush.msra.mxu0 0.0
        %514 = vmatpush.msra.mxu0 0.0
        %515 = vmatpush.msra.mxu0 0.0
        %516 = vmatpush.msra.mxu0 0.0
        %517 = vmatpush.msra.mxu0 0.0
        %518 = vmatpush.msra.mxu0 0.0
        %519 = vmatpush.msra.mxu0 0.0
        %520 = vmatpush.msra.mxu0 0.0
        %521 = vmatpush.msra.mxu0 0.0
        %522 = vmatpush.msra.mxu0 0.0
        %523 = vmatpush.msra.mxu0 0.0
        %524 = vmatpush.msra.mxu0 %v511
        %525 = vmatpush.msra.mxu0 %v510
        %526 = vmatpush.msra.mxu0 %v509
        %527 = vmatpush.msra.mxu0 %v508
        %528 = vmatmul.f32.gmra.mxu0 %v485
        %v529 = vpop.f32.mrf.mxu0
        %v530 = vadd.f32 0.0, %v529
        %531 = vdwg.mxu0
        %v532 = vld [vmem:[%s5] sm:$0xff]
        %v533 = vld [vmem:[%s5 + $0x8] sm:$0xff]
        %v534 = vld [vmem:[%s5 + $0x10] sm:$0xff]
        %v535 = vld [vmem:[%s5 + $0x18] sm:$0xff]
        %536 = vmatpush.msra.mxu0 0.0
        %537 = vmatpush.msra.mxu0 0.0
        %538 = vmatpush.msra.mxu0 0.0
        %539 = vmatpush.msra.mxu0 0.0
        %540 = vmatpush.msra.mxu0 0.0
        %541 = vmatpush.msra.mxu0 0.0
        %542 = vmatpush.msra.mxu0 0.0
        %543 = vmatpush.msra.mxu0 0.0
        %544 = vmatpush.msra.mxu0 0.0
        %545 = vmatpush.msra.mxu0 0.0
        %546 = vmatpush.msra.mxu0 0.0
        %547 = vmatpush.msra.mxu0 0.0
        %548 = vmatpush.msra.mxu0 %v535
        %549 = vmatpush.msra.mxu0 %v534
        %550 = vmatpush.msra.mxu0 %v533
        %551 = vmatpush.msra.mxu0 %v532
        %552 = vmatmul.f32.gmra.mxu0 %v485
        %v553 = vpop.f32.mrf.mxu0
        %v554 = vadd.f32 0.0, %v553
        %555 = vdwg.mxu0
        %v556 = vld [vmem:[%s6] sm:$0xff]
        %v557 = vld [vmem:[%s6 + $0x8] sm:$0xff]
        %v558 = vld [vmem:[%s6 + $0x10] sm:$0xff]
        %v559 = vld [vmem:[%s6 + $0x18] sm:$0xff]
        %vm560 = vcmask 64512
        %v562 = vsel %vm560, %v507, 0
        %v565 = vsel %vm560, %v530, 0
        %567 = vmatpush.xpose.msra.mxu0 0.0
        %568 = vmatpush.xpose.msra.mxu0 0.0
        %569 = vmatpush.xpose.msra.mxu0 0.0
        %570 = vmatpush.xpose.msra.mxu0 0.0
        %571 = vmatpush.xpose.msra.mxu0 0.0
        %572 = vmatpush.xpose.msra.mxu0 0.0
        %573 = vmatpush.xpose.msra.mxu0 0.0
        %574 = vmatpush.xpose.msra.mxu0 0.0
        %575 = vmatpush.xpose.msra.mxu0 0.0
        %576 = vmatpush.xpose.msra.mxu0 0.0
        %577 = vmatpush.xpose.msra.mxu0 0.0
        %578 = vmatpush.xpose.msra.mxu0 0.0
        %579 = vmatpush.xpose.msra.mxu0 0.0
        %580 = vmatpush.xpose.msra.mxu0 0.0
        %581 = vmatpush.xpose.msra.mxu0 0.0
        %582 = vmatpush.xpose.msra.mxu0 %v565
        %583 = vmatmul.f32.gmra.mxu0 %v562
        %v584 = vpop.f32.mrf.mxu0
        %v585 = vadd.f32 0.0, %v584
        %586 = vdwg.mxu0
        %v587 = vsel %vm560, %v585, -inf
        %588 = vmax.xlane.f32.xlu0 %v587
        %v589 = vpop.xlane.xlu0 %588
        %v590 = vsub.f32 %v585, %v589
        %v591 = vmul.f32 %v590, 1.442695
        %v592 = vpow.pop %v591
        %v593 = vsel %vm560, %v592, 0.0
        %594 = vadd.xlane.f32.xlu0 %v593
        %v595 = vpop.xlane.xlu0 %594
        %v596 = vrcp.pop %v595
        %v597 = vmul.f32 %v595, %v596
        %v598 = vsub.f32 1.0, %v597
        %v599 = vmul.f32 %v596, %v598
        %v600 = vadd.f32 %v596, %v599
        %vm601 = vweird.f32 %v595
        %vm602 = vweird.f32 %v596
        %vm603 = vmor %vm601, %vm602
        %v604 = vsel %vm603, %v596, %v600
        %v605 = vand.u32 2147483647, %v595
        %vm606 = vcmp.eq.f32.partialorder %v605, 8.507059e+37
        %v607 = vand.u32 %v595, 2147483648
        %v608 = vor.u32 1.1754944e-38, %v607
        %v609 = vsel %vm606, %v608, %v604
        %v610 = vmul.f32 %v592, %v609
        %v612 = vsel %vm560, %v610, 0
        %614 = vmatpush.msra.mxu0 0.0
        %615 = vmatpush.msra.mxu0 0.0
        %616 = vmatpush.msra.mxu0 0.0
        %617 = vmatpush.msra.mxu0 0.0
        %618 = vmatpush.msra.mxu0 0.0
        %619 = vmatpush.msra.mxu0 0.0
        %620 = vmatpush.msra.mxu0 0.0
        %621 = vmatpush.msra.mxu0 0.0
        %622 = vmatpush.msra.mxu0 0.0
        %623 = vmatpush.msra.mxu0 0.0
        %624 = vmatpush.msra.mxu0 0.0
        %625 = vmatpush.msra.mxu0 0.0
        %626 = vmatpush.msra.mxu0 0.0
        %627 = vmatpush.msra.mxu0 0.0
        %628 = vmatpush.msra.mxu0 0.0
        %629 = vmatpush.msra.mxu0 %v554
        %630 = vmatmul.f32.gmra.mxu0 %v612
        %v631 = vpop.f32.mrf.mxu0
        %v632 = vadd.f32 0.0, %v631
        %633 = vdwg.mxu0
        %634 = vrot.lane.b32.xlu0 %v507, 120
        %v635 = vpop.permute.xlu0 %634
        %636 = vrot.lane.b32.xlu0 %v530, 120
        %v637 = vpop.permute.xlu0 %636
        %v638 = vsel %vm560, %v635, 0
        %v640 = vsel %vm560, %v637, 0
        %642 = vmatpush.xpose.msra.mxu0 0.0
        %643 = vmatpush.xpose.msra.mxu0 0.0
        %644 = vmatpush.xpose.msra.mxu0 0.0
        %645 = vmatpush.xpose.msra.mxu0 0.0
        %646 = vmatpush.xpose.msra.mxu0 0.0
        %647 = vmatpush.xpose.msra.mxu0 0.0
        %648 = vmatpush.xpose.msra.mxu0 0.0
        %649 = vmatpush.xpose.msra.mxu0 0.0
        %650 = vmatpush.xpose.msra.mxu0 0.0
        %651 = vmatpush.xpose.msra.mxu0 0.0
        %652 = vmatpush.xpose.msra.mxu0 0.0
        %653 = vmatpush.xpose.msra.mxu0 0.0
        %654 = vmatpush.xpose.msra.mxu0 0.0
        %655 = vmatpush.xpose.msra.mxu0 0.0
        %656 = vmatpush.xpose.msra.mxu0 0.0
        %657 = vmatpush.xpose.msra.mxu0 %v640
        %658 = vmatmul.f32.gmra.mxu0 %v638
        %v659 = vpop.f32.mrf.mxu0
        %v660 = vadd.f32 0.0, %v659
        %661 = vdwg.mxu0
        %v662 = vsel %vm560, %v660, -inf
        %663 = vmax.xlane.f32.xlu0 %v662
        %v664 = vpop.xlane.xlu0 %663
        %v665 = vsub.f32 %v660, %v664
        %v666 = vmul.f32 %v665, 1.442695
        %v667 = vpow.pop %v666
        %v668 = vsel %vm560, %v667, 0.0
        %669 = vadd.xlane.f32.xlu0 %v668
        %v670 = vpop.xlane.xlu0 %669
        %v671 = vrcp.pop %v670
        %v672 = vmul.f32 %v670, %v671
        %v673 = vsub.f32 1.0, %v672
        %v674 = vmul.f32 %v671, %v673
        %v675 = vadd.f32 %v671, %v674
        %vm676 = vweird.f32 %v670
        %vm677 = vweird.f32 %v671
        %vm678 = vmor %vm676, %vm677
        %v679 = vsel %vm678, %v671, %v675
        %v680 = vand.u32 2147483647, %v670
        %vm681 = vcmp.eq.f32.partialorder %v680, 8.507059e+37
        %v682 = vand.u32 %v670, 2147483648
        %v683 = vor.u32 1.1754944e-38, %v682
        %v684 = vsel %vm681, %v683, %v679
        %v685 = vmul.f32 %v667, %v684
        %687 = vrot.lane.b32.xlu0 %v554, 120
        %v688 = vpop.permute.xlu0 %687
        %v691 = vsel %vm560, %v685, 0
        %693 = vmatpush.msra.mxu0 0.0
        %694 = vmatpush.msra.mxu0 0.0
        %695 = vmatpush.msra.mxu0 0.0
        %696 = vmatpush.msra.mxu0 0.0
        %697 = vmatpush.msra.mxu0 0.0
        %698 = vmatpush.msra.mxu0 0.0
        %699 = vmatpush.msra.mxu0 0.0
        %700 = vmatpush.msra.mxu0 0.0
        %701 = vmatpush.msra.mxu0 0.0
        %702 = vmatpush.msra.mxu0 0.0
        %703 = vmatpush.msra.mxu0 0.0
        %704 = vmatpush.msra.mxu0 0.0
        %705 = vmatpush.msra.mxu0 0.0
        %706 = vmatpush.msra.mxu0 0.0
        %707 = vmatpush.msra.mxu0 0.0
        %708 = vmatpush.msra.mxu0 %v688
        %709 = vmatmul.f32.gmra.mxu0 %v691
        %v710 = vpop.f32.mrf.mxu0
        %v711 = vadd.f32 0.0, %v710
        %712 = vdwg.mxu0
        %v714 = vsel %vm560, %v711, 0
        %716 = vmatpush.msra.mxu0 0.0
        %717 = vmatpush.msra.mxu0 0.0
        %718 = vmatpush.msra.mxu0 0.0
        %719 = vmatpush.msra.mxu0 0.0
        %720 = vmatpush.msra.mxu0 0.0
        %721 = vmatpush.msra.mxu0 0.0
        %722 = vmatpush.msra.mxu0 0.0
        %723 = vmatpush.msra.mxu0 0.0
        %724 = vmatpush.msra.mxu0 0.0
        %725 = vmatpush.msra.mxu0 0.0
        %726 = vmatpush.msra.mxu0 0.0
        %727 = vmatpush.msra.mxu0 0.0
        %728 = vmatpush.msra.mxu0 0.0
        %729 = vmatpush.msra.mxu0 0.0
        %730 = vmatpush.msra.mxu0 0.0
        %731 = vmatpush.msra.mxu0 %v557
        %732 = vmatmul.f32.gmra.mxu0 %v714
        %v733 = vpop.f32.mrf.mxu0
        %v734 = vadd.f32 0.0, %v733
        %735 = vdwg.mxu0
        %v737 = vsel %vm560, %v632, 0
        %739 = vmatpush.msra.mxu0 0.0
        %740 = vmatpush.msra.mxu0 0.0
        %741 = vmatpush.msra.mxu0 0.0
        %742 = vmatpush.msra.mxu0 0.0
        %743 = vmatpush.msra.mxu0 0.0
        %744 = vmatpush.msra.mxu0 0.0
        %745 = vmatpush.msra.mxu0 0.0
        %746 = vmatpush.msra.mxu0 0.0
        %747 = vmatpush.msra.mxu0 0.0
        %748 = vmatpush.msra.mxu0 0.0
        %749 = vmatpush.msra.mxu0 0.0
        %750 = vmatpush.msra.mxu0 0.0
        %751 = vmatpush.msra.mxu0 0.0
        %752 = vmatpush.msra.mxu0 0.0
        %753 = vmatpush.msra.mxu0 0.0
        %754 = vmatpush.msra.mxu0 %v556
        %755 = vmatmul.f32.gmra.mxu0 %v737
        %v756 = vpop.f32.mrf.mxu0
        %v757 = vadd.f32 %v734, %v756
        %758 = vdwg.mxu0
        %759 = vrot.lane.b32.xlu0 %v507, 112
        %v760 = vpop.permute.xlu0 %759
        %761 = vrot.lane.b32.xlu0 %v530, 112
        %v762 = vpop.permute.xlu0 %761
        %v763 = vsel %vm560, %v760, 0
        %v765 = vsel %vm560, %v762, 0
        %767 = vmatpush.xpose.msra.mxu0 0.0
        %768 = vmatpush.xpose.msra.mxu0 0.0
        %769 = vmatpush.xpose.msra.mxu0 0.0
        %770 = vmatpush.xpose.msra.mxu0 0.0
        %771 = vmatpush.xpose.msra.mxu0 0.0
        %772 = vmatpush.xpose.msra.mxu0 0.0
        %773 = vmatpush.xpose.msra.mxu0 0.0
        %774 = vmatpush.xpose.msra.mxu0 0.0
        %775 = vmatpush.xpose.msra.mxu0 0.0
        %776 = vmatpush.xpose.msra.mxu0 0.0
        %777 = vmatpush.xpose.msra.mxu0 0.0
        %778 = vmatpush.xpose.msra.mxu0 0.0
        %779 = vmatpush.xpose.msra.mxu0 0.0
        %780 = vmatpush.xpose.msra.mxu0 0.0
        %781 = vmatpush.xpose.msra.mxu0 0.0
        %782 = vmatpush.xpose.msra.mxu0 %v765
        %783 = vmatmul.f32.gmra.mxu0 %v763
        %v784 = vpop.f32.mrf.mxu0
        %v785 = vadd.f32 0.0, %v784
        %786 = vdwg.mxu0
        %v787 = vsel %vm560, %v785, -inf
        %788 = vmax.xlane.f32.xlu0 %v787
        %v789 = vpop.xlane.xlu0 %788
        %v790 = vsub.f32 %v785, %v789
        %v791 = vmul.f32 %v790, 1.442695
        %v792 = vpow.pop %v791
        %v793 = vsel %vm560, %v792, 0.0
        %794 = vadd.xlane.f32.xlu0 %v793
        %v795 = vpop.xlane.xlu0 %794
        %v796 = vrcp.pop %v795
        %v797 = vmul.f32 %v795, %v796
        %v798 = vsub.f32 1.0, %v797
        %v799 = vmul.f32 %v796, %v798
        %v800 = vadd.f32 %v796, %v799
        %vm801 = vweird.f32 %v795
        %vm802 = vweird.f32 %v796
        %vm803 = vmor %vm801, %vm802
        %v804 = vsel %vm803, %v796, %v800
        %v805 = vand.u32 2147483647, %v795
        %vm806 = vcmp.eq.f32.partialorder %v805, 8.507059e+37
        %v807 = vand.u32 %v795, 2147483648
        %v808 = vor.u32 1.1754944e-38, %v807
        %v809 = vsel %vm806, %v808, %v804
        %v810 = vmul.f32 %v792, %v809
        %811 = vrot.lane.b32.xlu0 %v554, 112
        %v812 = vpop.permute.xlu0 %811
        %v815 = vsel %vm560, %v810, 0
        %817 = vmatpush.msra.mxu0 0.0
        %818 = vmatpush.msra.mxu0 0.0
        %819 = vmatpush.msra.mxu0 0.0
        %820 = vmatpush.msra.mxu0 0.0
        %821 = vmatpush.msra.mxu0 0.0
        %822 = vmatpush.msra.mxu0 0.0
        %823 = vmatpush.msra.mxu0 0.0
        %824 = vmatpush.msra.mxu0 0.0
        %825 = vmatpush.msra.mxu0 0.0
        %826 = vmatpush.msra.mxu0 0.0
        %827 = vmatpush.msra.mxu0 0.0
        %828 = vmatpush.msra.mxu0 0.0
        %829 = vmatpush.msra.mxu0 0.0
        %830 = vmatpush.msra.mxu0 0.0
        %831 = vmatpush.msra.mxu0 0.0
        %832 = vmatpush.msra.mxu0 %v812
        %833 = vmatmul.f32.gmra.mxu0 %v815
        %v834 = vpop.f32.mrf.mxu0
        %v835 = vadd.f32 0.0, %v834
        %836 = vdwg.mxu0
        %v838 = vsel %vm560, %v835, 0
        %840 = vmatpush.msra.mxu0 0.0
        %841 = vmatpush.msra.mxu0 0.0
        %842 = vmatpush.msra.mxu0 0.0
        %843 = vmatpush.msra.mxu0 0.0
        %844 = vmatpush.msra.mxu0 0.0
        %845 = vmatpush.msra.mxu0 0.0
        %846 = vmatpush.msra.mxu0 0.0
        %847 = vmatpush.msra.mxu0 0.0
        %848 = vmatpush.msra.mxu0 0.0
        %849 = vmatpush.msra.mxu0 0.0
        %850 = vmatpush.msra.mxu0 0.0
        %851 = vmatpush.msra.mxu0 0.0
        %852 = vmatpush.msra.mxu0 0.0
        %853 = vmatpush.msra.mxu0 0.0
        %854 = vmatpush.msra.mxu0 0.0
        %855 = vmatpush.msra.mxu0 %v558
        %856 = vmatmul.f32.gmra.mxu0 %v838
        %v857 = vpop.f32.mrf.mxu0
        %v858 = vadd.f32 0.0, %v857
        %859 = vdwg.mxu0
        %v860 = vadd.f32 %v757, %v858
        %861 = vrot.lane.b32.xlu0 %v507, 104
        %v862 = vpop.permute.xlu0 %861
        %863 = vrot.lane.b32.xlu0 %v530, 104
        %v864 = vpop.permute.xlu0 %863
        %v865 = vsel %vm560, %v862, 0
        %v867 = vsel %vm560, %v864, 0
        %869 = vmatpush.xpose.msra.mxu0 0.0
        %870 = vmatpush.xpose.msra.mxu0 0.0
        %871 = vmatpush.xpose.msra.mxu0 0.0
        %872 = vmatpush.xpose.msra.mxu0 0.0
        %873 = vmatpush.xpose.msra.mxu0 0.0
        %874 = vmatpush.xpose.msra.mxu0 0.0
        %875 = vmatpush.xpose.msra.mxu0 0.0
        %876 = vmatpush.xpose.msra.mxu0 0.0
        %877 = vmatpush.xpose.msra.mxu0 0.0
        %878 = vmatpush.xpose.msra.mxu0 0.0
        %879 = vmatpush.xpose.msra.mxu0 0.0
        %880 = vmatpush.xpose.msra.mxu0 0.0
        %881 = vmatpush.xpose.msra.mxu0 0.0
        %882 = vmatpush.xpose.msra.mxu0 0.0
        %883 = vmatpush.xpose.msra.mxu0 0.0
        %884 = vmatpush.xpose.msra.mxu0 %v867
        %885 = vmatmul.f32.gmra.mxu0 %v865
        %v886 = vpop.f32.mrf.mxu0
        %v887 = vadd.f32 0.0, %v886
        %888 = vdwg.mxu0
        %v889 = vsel %vm560, %v887, -inf
        %890 = vmax.xlane.f32.xlu0 %v889
        %v891 = vpop.xlane.xlu0 %890
        %v892 = vsub.f32 %v887, %v891
        %v893 = vmul.f32 %v892, 1.442695
        %v894 = vpow.pop %v893
        %v895 = vsel %vm560, %v894, 0.0
        %896 = vadd.xlane.f32.xlu0 %v895
        %v897 = vpop.xlane.xlu0 %896
        %v898 = vrcp.pop %v897
        %v899 = vmul.f32 %v897, %v898
        %v900 = vsub.f32 1.0, %v899
        %v901 = vmul.f32 %v898, %v900
        %v902 = vadd.f32 %v898, %v901
        %vm903 = vweird.f32 %v897
        %vm904 = vweird.f32 %v898
        %vm905 = vmor %vm903, %vm904
        %v906 = vsel %vm905, %v898, %v902
        %v907 = vand.u32 2147483647, %v897
        %vm908 = vcmp.eq.f32.partialorder %v907, 8.507059e+37
        %v909 = vand.u32 %v897, 2147483648
        %v910 = vor.u32 1.1754944e-38, %v909
        %v911 = vsel %vm908, %v910, %v906
        %v912 = vmul.f32 %v894, %v911
        %913 = vrot.lane.b32.xlu0 %v554, 104
        %v914 = vpop.permute.xlu0 %913
        %v917 = vsel %vm560, %v912, 0
        %919 = vmatpush.msra.mxu0 0.0
        %920 = vmatpush.msra.mxu0 0.0
        %921 = vmatpush.msra.mxu0 0.0
        %922 = vmatpush.msra.mxu0 0.0
        %923 = vmatpush.msra.mxu0 0.0
        %924 = vmatpush.msra.mxu0 0.0
        %925 = vmatpush.msra.mxu0 0.0
        %926 = vmatpush.msra.mxu0 0.0
        %927 = vmatpush.msra.mxu0 0.0
        %928 = vmatpush.msra.mxu0 0.0
        %929 = vmatpush.msra.mxu0 0.0
        %930 = vmatpush.msra.mxu0 0.0
        %931 = vmatpush.msra.mxu0 0.0
        %932 = vmatpush.msra.mxu0 0.0
        %933 = vmatpush.msra.mxu0 0.0
        %934 = vmatpush.msra.mxu0 %v914
        %935 = vmatmul.f32.gmra.mxu0 %v917
        %v936 = vpop.f32.mrf.mxu0
        %v937 = vadd.f32 0.0, %v936
        %938 = vdwg.mxu0
        %v940 = vsel %vm560, %v937, 0
        %942 = vmatpush.msra.mxu0 0.0
        %943 = vmatpush.msra.mxu0 0.0
        %944 = vmatpush.msra.mxu0 0.0
        %945 = vmatpush.msra.mxu0 0.0
        %946 = vmatpush.msra.mxu0 0.0
        %947 = vmatpush.msra.mxu0 0.0
        %948 = vmatpush.msra.mxu0 0.0
        %949 = vmatpush.msra.mxu0 0.0
        %950 = vmatpush.msra.mxu0 0.0
        %951 = vmatpush.msra.mxu0 0.0
        %952 = vmatpush.msra.mxu0 0.0
        %953 = vmatpush.msra.mxu0 0.0
        %954 = vmatpush.msra.mxu0 0.0
        %955 = vmatpush.msra.mxu0 0.0
        %956 = vmatpush.msra.mxu0 0.0
        %957 = vmatpush.msra.mxu0 %v559
        %958 = vmatmul.f32.gmra.mxu0 %v940
        %v959 = vpop.f32.mrf.mxu0
        %v960 = vadd.f32 0.0, %v959
        %961 = vdwg.mxu0
        %v962 = vadd.f32 %v860, %v960
        %v963 = vadd.f32 %v436, %v962
        %v964 = vld [vmem:[%s7] sm:$0x1]
        %v965 = vld [vmem:[%s8] sm:$0x1]
        %v966 = vsel %vm439, %v963, 0.0
        %967 = vadd.xlane.f32.xlu0 %v966
        %v968 = vpop.xlane.xlu0 %967
        %v969 = vmul.f32 %v963, %v963
        %v970 = vsel %vm439, %v969, 0.0
        %971 = vadd.xlane.f32.xlu0 %v970
        %v972 = vpop.xlane.xlu0 %971
        %v973 = vmul.f32 %v968, %v453
        %v974 = vmul.f32 %v972, %v453
        %v975 = vmul.f32 %v973, %v973
        %v976 = vsub.f32 %v974, %v975
        %v977 = vmax.f32 %v976, 0.0
        %v978 = vadd.f32 %v977, 1e-05
        %v979 = vrsqrt.pop %v978
        %v980 = vmul.f32 %v979, %v978
        %v981 = vmul.f32 %v980, %v979
        %v982 = vmul.f32 0.5, %v981
        %v983 = vsub.f32 1.5, %v982
        %v984 = vmul.f32 %v979, %v983
        %vm985 = vweird.f32 %v978
        %vm986 = vweird.f32 %v979
        %vm987 = vmor %vm985, %vm986
        %v988 = vsel %vm987, %v979, %v984
        %v989 = vsub.f32 %v963, %v973
        %v990 = vmul.f32 %v989, %v988
        %v992 = vperm.slane %v964, 0
        %v994 = vmul.f32 %v990, %v992
        %v996 = vperm.slane %v965, 0
        %v998 = vadd.f32 %v994, %v996
        %v999 = vld [vmem:[%s9] sm:$0xff]
        %v1000 = vld [vmem:[%s9 + $0x8] sm:$0xff]
        %v1001 = vld [vmem:[%s9 + $0x10] sm:$0xff]
        %v1002 = vld [vmem:[%s9 + $0x18] sm:$0xff]
        %v1003 = vld [vmem:[%s10] sm:$0x1]
        %v1005 = vperm.slane %v1003, 0
        %v1008 = vsel %vm439, %v998, 0
        %1010 = vmatpush.msra.mxu0 0.0
        %1011 = vmatpush.msra.mxu0 0.0
        %1012 = vmatpush.msra.mxu0 0.0
        %1013 = vmatpush.msra.mxu0 0.0
        %1014 = vmatpush.msra.mxu0 0.0
        %1015 = vmatpush.msra.mxu0 0.0
        %1016 = vmatpush.msra.mxu0 0.0
        %1017 = vmatpush.msra.mxu0 0.0
        %1018 = vmatpush.msra.mxu0 0.0
        %1019 = vmatpush.msra.mxu0 0.0
        %1020 = vmatpush.msra.mxu0 0.0
        %1021 = vmatpush.msra.mxu0 0.0
        %1022 = vmatpush.msra.mxu0 %v1002
        %1023 = vmatpush.msra.mxu0 %v1001
        %1024 = vmatpush.msra.mxu0 %v1000
        %1025 = vmatpush.msra.mxu0 %v999
        %1026 = vmatmul.f32.gmra.mxu0 %v1008
        %v1027 = vpop.f32.mrf.mxu0
        %v1028 = vadd.f32 %v1005, %v1027
        %1029 = vdwg.mxu0
        %v1030 = vmax.f32 %v1028, 0.0
        %v1031 = vld [vmem:[%s11] sm:$0xff]
        %v1032 = vld [vmem:[%s11 + $0x8] sm:$0xff]
        %v1033 = vld [vmem:[%s11 + $0x10] sm:$0xff]
        %v1034 = vld [vmem:[%s11 + $0x18] sm:$0xff]
        %v1035 = vld [vmem:[%s11 + $0x20] sm:$0xff]
        %v1036 = vld [vmem:[%s11 + $0x28] sm:$0xff]
        %v1037 = vld [vmem:[%s11 + $0x30] sm:$0xff]
        %v1038 = vld [vmem:[%s11 + $0x38] sm:$0xff]
        %v1039 = vld [vmem:[%s11 + $0x40] sm:$0xff]
        %v1040 = vld [vmem:[%s11 + $0x48] sm:$0xff]
        %v1041 = vld [vmem:[%s11 + $0x50] sm:$0xff]
        %v1042 = vld [vmem:[%s11 + $0x58] sm:$0xff]
        %v1043 = vld [vmem:[%s11 + $0x60] sm:$0xff]
        %v1044 = vld [vmem:[%s11 + $0x68] sm:$0xff]
        %v1045 = vld [vmem:[%s11 + $0x70] sm:$0xff]
        %v1046 = vld [vmem:[%s11 + $0x78] sm:$0xff]
        %v1047 = vld [vmem:[%s12] sm:$0x1]
        %v1049 = vperm.slane %v1047, 0
        %1051 = vmatpush.msra.mxu0 %v1046
        %1052 = vmatpush.msra.mxu0 %v1045
        %1053 = vmatpush.msra.mxu0 %v1044
        %1054 = vmatpush.msra.mxu0 %v1043
        %1055 = vmatpush.msra.mxu0 %v1042
        %1056 = vmatpush.msra.mxu0 %v1041
        %1057 = vmatpush.msra.mxu0 %v1040
        %1058 = vmatpush.msra.mxu0 %v1039
        %1059 = vmatpush.msra.mxu0 %v1038
        %1060 = vmatpush.msra.mxu0 %v1037
        %1061 = vmatpush.msra.mxu0 %v1036
        %1062 = vmatpush.msra.mxu0 %v1035
        %1063 = vmatpush.msra.mxu0 %v1034
        %1064 = vmatpush.msra.mxu0 %v1033
        %1065 = vmatpush.msra.mxu0 %v1032
        %1066 = vmatpush.msra.mxu0 %v1031
        %1067 = vmatmul.f32.gmra.mxu0 %v1030
        %v1068 = vpop.f32.mrf.mxu0
        %v1069 = vadd.f32 %v1049, %v1068
        %1070 = vdwg.mxu0
        %v1071 = vadd.f32 %v963, %v1069
        %1072 = vst.msk [vmem:[%s431] sm:$0xff] %vm439, %v1071
        %s1073 = sand.u32 %s313, 1
        %s1074 = scalar_lea.sflag [#allocation3], %s1073
        %s1075 = sand.u32 %s313, 1
        %s1076 = smul.addr %s1075, 8
        %s1077 = scalar_lea.vmem [#allocation2], %s1076
        // Predicated region
        $region73: #{transformer_encoder_block_forward.1} parent=71 // pred_check
          %p1078 = pneg %p323
        $region74: #{transformer_encoder_block_forward.1} parent=71 // pred_check_branch
          %1080 = sbr.rel (%p1078) target = $region76
        $region75: #{transformer_encoder_block_forward.1} parent=71 // pred_region
          %1082 = vsyncadd %s1074, 0
          %s1083 = smul.addr %s27, 8
          %s1084 = scalar_lea.hbm %s13, %s1083
          %s1086 = sshll.u32 %s1077, 4
          %s1087 = int_to_ptr.vmem [resolvable:$true] %s1086
          %s1088 = sshll.u32 %s1084, 4
          %s1089 = int_to_ptr.hbm [resolvable:$true] %s1088
          %1091 = dma.vmem_to_hbm [thread:$0]  %s1087, 128, %s1089, %s1074
        $region76: #{transformer_encoder_block_forward.1} parent=71 // pred_fallthru
          _
      $region72: #{transformer_encoder_block_forward.1} parent=5 // pred_fallthru
        _
      %p1092 = scmp.le.s32.totalorder 2, %s22
      // Predicated region
      $region77: #{transformer_encoder_block_forward.1} parent=5 // pred_check
        %p1093 = pneg %p1092
      $region78: #{transformer_encoder_block_forward.1} parent=5 // pred_check_branch
        %1095 = sbr.rel (%p1093) target = $region80
      $region79: #{transformer_encoder_block_forward.1} parent=5 // pred_region
        %s1096 = ssub.s32 %s22, 2
        // Predicated region
        $region81: #{transformer_encoder_block_forward.1} parent=79 // pred_check
          %p1097 = pneg %p329
        $region82: #{transformer_encoder_block_forward.1} parent=79 // pred_check_branch
          %1099 = sbr.rel (%p1097) target = $region84
        $region83: #{transformer_encoder_block_forward.1} parent=79 // pred_region
          %s1100 = sand.u32 %s314, 1
          %s1101 = scalar_lea.sflag [#allocation3], %s1100
          %s1102 = sand.u32 %s314, 1
          %s1103 = smul.addr %s1102, 8
          %s1104 = scalar_lea.vmem [#allocation2], %s1103
          %1106 = dma.done %s1101, 128
        $region84: #{transformer_encoder_block_forward.1} parent=79 // pred_fallthru
          _
      $region80: #{transformer_encoder_block_forward.1} parent=5 // pred_fallthru
        _
    $region6: #{transformer_encoder_block_forward.1} parent=1 // loop_footer
      %s26 = sadd.s32 1, %s22
    $region7: #{transformer_encoder_block_forward.1} parent=1 // loop_footer_branch
      %21 = sbr.rel target = $region3
    $region8: #{transformer_encoder_block_forward.1} parent=1 // loop_exit
      _
    %1107 = vsyncpa [#allocation3], 1
    %s1108 = scalar_lea.sflag [#allocation3], 1
    %1109 = vsyncpa %s1108, 1

</llo_original>
